<compile_context>
chip_gen: v5e
topology: v5e:2x2
jax: 0.10.0
libtpu: 0.0.40
codegen_flags: <defaults>
</compile_context>

<pallas_src>
import functools
import math

import numpy as np
import jax
import jax.numpy as jnp
from jax.experimental import pallas as pl
from jax.experimental.pallas import tpu as pltpu


LANE = 128
TM_MAX = 512                       # upper bound for row / K tiles (clamped to problem)
COMPUTE_DTYPE = jnp.bfloat16       # MXU input dtype; accumulation stays f32
VMEM_LIMIT = 48 * 1024 * 1024      # explicit scoped-VMEM cap (headroom under v7x 64 MiB)
RESIDENT_XWB_BYTES = 16 * 1024 * 1024   # keep XWb VMEM-resident only below this size


# ---------------------------------------------------------------------------
# Helpers
# ---------------------------------------------------------------------------
def _round_up(x, m):
    return (x + m - 1) // m * m


def _choose_tile(n):
    """Largest MXU-friendly tile (<=512) that doesn't cause excessive padding."""
    base = _round_up(max(n, 1), LANE)
    tile = min(TM_MAX, base)
    while tile > LANE and _round_up(n, tile) > (base * 3) // 2:
        tile //= 2
    return tile, _round_up(n, tile)


def _pad2d(x, rows, cols):
    return jnp.pad(x, ((0, rows - x.shape[0]), (0, cols - x.shape[1])))


# ---------------------------------------------------------------------------
# Kernel 1: theta for layer 1 only   XWb = X @ W + b   (computed once)
# ---------------------------------------------------------------------------
def _theta_kernel(x_ref, w_ref, b_ref, o_ref):
    xw = jnp.dot(x_ref[...], w_ref[...], preferred_element_type=jnp.float32)
    o_ref[...] = (xw + b_ref[...]).astype(o_ref.dtype)   # bias add in f32, store bf16


def theta_call(x_c, w_c, b_f32, *, tm):
    """X @ W + b, row-tiled.  x_c:(Np,Dinp) bf16, w_c:(Dinp,Dp) bf16, b:(Dp,) f32."""
    Np, Din = x_c.shape
    Dp = w_c.shape[1]
    return pl.pallas_call(
        _theta_kernel,
        out_shape=jax.ShapeDtypeStruct((Np, Dp), x_c.dtype),
        grid_spec=pltpu.PrefetchScalarGridSpec(
            num_scalar_prefetch=0,
            grid=(Np // tm,),
            in_specs=[
                pl.BlockSpec((tm, Din), lambda i: (i, 0)),   # row tile of X (lane-dense)
                pl.BlockSpec((Din, Dp), lambda i: (0, 0)),   # full W (small, resident)
                pl.BlockSpec((1, Dp), lambda i: (0, 0)),     # bias row (f32)
            ],
            out_specs=pl.BlockSpec((tm, Dp), lambda i: (i, 0)),
        ),
        compiler_params=pltpu.CompilerParams(
            dimension_semantics=("parallel",),
            vmem_limit_bytes=VMEM_LIMIT),
    )(x_c, w_c, b_f32.reshape(1, Dp))


# ---------------------------------------------------------------------------
# Kernel 2: propagation + ReLU + FUSED next-layer theta
#   h      = relu(A @ XWb)
#   xwb_nx = h @ W_next + b_next
# K-tiled with persistent f32 VMEM accumulator; XWb optionally VMEM-resident.
# ---------------------------------------------------------------------------
def _prop_theta_kernel(a_ref, xwb_ref, wn_ref, bn_ref, h_ref, xwbn_ref,
                       acc_ref, *, tk, resident):
    k = pl.program_id(1)

    if resident:
        start = pl.multiple_of(k * tk, tk)
        xwb = xwb_ref[pl.ds(start, tk), :]         # slice the resident full XWb
    else:
        xwb = xwb_ref[...]                         # streamed (tk, Dp) tile

    prod = jnp.dot(a_ref[...], xwb, preferred_element_type=jnp.float32)

    @pl.when(k == 0)
    def _():
        acc_ref[...] = prod                        # no zero-fill + add at k==0

    @pl.when(k > 0)
    def _():
        acc_ref[...] += prod

    @pl.when(k == pl.num_programs(1) - 1)
    def _():
        h = jnp.maximum(acc_ref[...], 0.0)                     # ReLU in f32
        h_ref[...] = h.astype(h_ref.dtype)
        xwbn = jnp.dot(h.astype(wn_ref.dtype), wn_ref[...],
                       preferred_element_type=jnp.float32) + bn_ref[...]
        xwbn_ref[...] = xwbn.astype(xwbn_ref.dtype)


def prop_theta_call(a_c, xwb_c, w_next, b_next, *, tm, tk):
    """(relu(A @ XWb), relu(A @ XWb) @ W_next + b_next)."""
    Np = a_c.shape[0]
    Dp = xwb_c.shape[1]
    Dn = w_next.shape[1]
    resident = (Np * Dp * xwb_c.dtype.itemsize) <= RESIDENT_XWB_BYTES
    if resident:
        xwb_spec = pl.BlockSpec((Np, Dp), lambda i, k: (0, 0))   # DMA'd once, resident
    else:
        xwb_spec = pl.BlockSpec((tk, Dp), lambda i, k: (k, 0))   # streamed fallback
    kernel = functools.partial(_prop_theta_kernel, tk=tk, resident=resident)
    return pl.pallas_call(
        kernel,
        out_shape=(jax.ShapeDtypeStruct((Np, Dp), xwb_c.dtype),
                   jax.ShapeDtypeStruct((Np, Dn), xwb_c.dtype)),
        grid_spec=pltpu.PrefetchScalarGridSpec(
            num_scalar_prefetch=0,
            grid=(Np // tm, Np // tk),
            in_specs=[
                pl.BlockSpec((tm, tk), lambda i, k: (i, k)),     # A row/col tile
                xwb_spec,
                pl.BlockSpec((Dp, Dn), lambda i, k: (0, 0)),     # W_next (tiny, resident)
                pl.BlockSpec((1, Dn), lambda i, k: (0, 0)),      # b_next (f32)
            ],
            out_specs=(pl.BlockSpec((tm, Dp), lambda i, k: (i, 0)),
                       pl.BlockSpec((tm, Dn), lambda i, k: (i, 0))),
            scratch_shapes=[pltpu.VMEM((tm, Dp), jnp.float32)],
        ),
        compiler_params=pltpu.CompilerParams(
            dimension_semantics=("parallel", "arbitrary"),
            vmem_limit_bytes=VMEM_LIMIT),
    )(a_c, xwb_c, w_next, b_next.reshape(1, Dn))


# ---------------------------------------------------------------------------
# Kernel 3: final propagation + ReLU (no fused theta)   out = relu(A @ XWb)
# ---------------------------------------------------------------------------
def _prop_relu_kernel(a_ref, xwb_ref, o_ref, acc_ref, *, tk, resident):
    k = pl.program_id(1)

    if resident:
        start = pl.multiple_of(k * tk, tk)
        xwb = xwb_ref[pl.ds(start, tk), :]
    else:
        xwb = xwb_ref[...]

    prod = jnp.dot(a_ref[...], xwb, preferred_element_type=jnp.float32)

    @pl.when(k == 0)
    def _():
        acc_ref[...] = prod

    @pl.when(k > 0)
    def _():
        acc_ref[...] += prod

    @pl.when(k == pl.num_programs(1) - 1)
    def _():
        o_ref[...] = jnp.maximum(acc_ref[...], 0.0).astype(o_ref.dtype)


def prop_relu_call(a_c, xwb_c, *, tm, tk):
    """relu(A @ XWb)."""
    Np = a_c.shape[0]
    Dp = xwb_c.shape[1]
    resident = (Np * Dp * xwb_c.dtype.itemsize) <= RESIDENT_XWB_BYTES
    if resident:
        xwb_spec = pl.BlockSpec((Np, Dp), lambda i, k: (0, 0))
    else:
        xwb_spec = pl.BlockSpec((tk, Dp), lambda i, k: (k, 0))
    kernel = functools.partial(_prop_relu_kernel, tk=tk, resident=resident)
    return pl.pallas_call(
        kernel,
        out_shape=jax.ShapeDtypeStruct((Np, Dp), xwb_c.dtype),
        grid_spec=pltpu.PrefetchScalarGridSpec(
            num_scalar_prefetch=0,
            grid=(Np // tm, Np // tk),
            in_specs=[
                pl.BlockSpec((tm, tk), lambda i, k: (i, k)),
                xwb_spec,
            ],
            out_specs=pl.BlockSpec((tm, Dp), lambda i, k: (i, 0)),
            scratch_shapes=[pltpu.VMEM((tm, Dp), jnp.float32)],
        ),
        compiler_params=pltpu.CompilerParams(
            dimension_semantics=("parallel", "arbitrary"),
            vmem_limit_bytes=VMEM_LIMIT),
    )(a_c, xwb_c)


# ---------------------------------------------------------------------------
# GNNModelDGL forward (HGNN branch)
# ---------------------------------------------------------------------------
@jax.jit
def gnn_hgnn_forward(X, L_hgnn, A_hgnnp, W1, b1, W2, b2, W3, b3):
    N, in_dim = X.shape
    hid = W1.shape[1]
    out_dim = W2.shape[1]

    tile, Np = _choose_tile(N)          # tm == tk == tile, clamped to problem size
    Dinp = _round_up(in_dim, LANE)      # lane-dense input width
    Hp = _round_up(hid, LANE)           # lane-dense hidden width
    Op = _round_up(out_dim, LANE)       # lane-dense output width

    cdt = COMPUTE_DTYPE
    # Pad + cast once in the wrapper (outside all grid loops).  Zero padding is exact:
    # padded A rows/cols and padded W rows/cols (and b entries) are zero, so the padded
    # region never leaks into the valid [:N, :out_dim] output slice.
    L_c = _pad2d(L_hgnn, Np, Np).astype(cdt)
    A_c = _pad2d(A_hgnnp, Np, Np).astype(cdt)
    X_c = _pad2d(X, Np, Dinp).astype(cdt)
    W1p = _pad2d(W1, Dinp, Hp).astype(cdt)
    W2p = _pad2d(W2, Hp, Op).astype(cdt)
    W3p = _pad2d(W3, Op, Op).astype(cdt)
    b1p = jnp.pad(b1, (0, Hp - hid)).astype(jnp.float32)
    b2p = jnp.pad(b2, (0, Op - out_dim)).astype(jnp.float32)
    b3p = jnp.pad(b3, (0, Op - out_dim)).astype(jnp.float32)

    # Layer 1 theta (only theta kernel left; layers 2/3 thetas are fused into prop).
    xwb1 = theta_call(X_c, W1p, b1p, tm=tile)                            # (Np, Hp)
    # Layer 1 prop + fused layer-2 theta.  h1 is never returned, so only xwb2 is used.
    _h1, xwb2 = prop_theta_call(L_c, xwb1, W2p, b2p, tm=tile, tk=tile)   # (Np,Hp),(Np,Op)
    # Layer 2 prop + fused layer-3 theta.
    h2, xwb3 = prop_theta_call(A_c, xwb2, W3p, b3p, tm=tile, tk=tile)    # (Np,Op),(Np,Op)
    # Layer 3 prop (final).
    logits = prop_relu_call(A_c, xwb3, tm=tile, tk=tile)                 # (Np, Op)

    h2_out = h2[:N, :out_dim].astype(jnp.float32)
    lg_out = logits[:N, :out_dim].astype(jnp.float32)
    return h2_out, lg_out


# ---------------------------------------------------------------------------
# Host-side glue: hypergraph structure matrices (NumPy, no XLA trace bloat)
# ---------------------------------------------------------------------------
def build_hypergraph_matrices(num_v, e_list):
    """Dense incidence-based propagation matrices matching dhg semantics."""
    E = len(e_list)
    H = np.zeros((num_v, E), dtype=np.float32)
    for e_idx, verts in enumerate(e_list):
        H[list(verts), e_idx] = 1.0
    Dv = H.sum(axis=1)                    # vertex degree (num incident hyperedges)
    De = H.sum(axis=0)                    # hyperedge degree (num vertices)
    Dv_inv = np.where(Dv > 0, 1.0 / Dv, 0.0)
    Dv_isqrt = np.where(Dv > 0, 1.0 / np.sqrt(Dv), 0.0)
    De_inv = np.where(De > 0, 1.0 / De, 0.0)
    # smoothing_with_HGNN: Dv^{-1/2} H W De^{-1} H^T Dv^{-1/2}   (W_e = I)
    L_hgnn = (Dv_isqrt[:, None] * H) @ (De_inv[:, None] * (H.T * Dv_isqrt[None, :]))
    # e2v(mean) o v2e(mean): Dv^{-1} H De^{-1} H^T
    A_hgnnp = (Dv_inv[:, None] * H) @ (De_inv[:, None] * H.T)
    return jnp.asarray(L_hgnn), jnp.asarray(A_hgnnp)


def init_linear(key, fan_in, fan_out):
    """Deterministic PyTorch-style Linear init (uniform +/- 1/sqrt(fan_in))."""
    kw, kb = jax.random.split(key)
    bound = 1.0 / jnp.sqrt(jnp.float32(fan_in))
    W = jax.random.uniform(kw, (fan_in, fan_out), jnp.float32, -bound, bound)
    b = jax.random.uniform(kb, (fan_out,), jnp.float32, -bound, bound)
    return W, b


if __name__ == "__main__":
    # Small deterministic problem: ring graph on N nodes; each graph edge becomes a
    # 2-vertex hyperedge (as GNNModelDGL.get_hg does).
    N = 64
    in_dim, hidden_dim, out_dim = 32, 32, 16

    edges = [(i, (i + 1) % N) for i in range(N)]
    L_hgnn, A_hgnnp = build_hypergraph_matrices(N, edges)

    key = jax.random.PRNGKey(0)
    k_x, k1, k2, k3 = jax.random.split(key, 4)
    X = jax.random.normal(k_x, (N, in_dim), jnp.float32)

    W1, b1 = init_linear(k1, in_dim, hidden_dim)
    W2, b2 = init_linear(k2, hidden_dim, out_dim)
    W3, b3 = init_linear(k3, out_dim, out_dim)

    h, logits = gnn_hgnn_forward(X, L_hgnn, A_hgnnp, W1, b1, W2, b2, W3, b3)
    jax.block_until_ready((h, logits))

    # --- sanity checks ---
    # (a) bf16-mirrored reference (same quantization points as the kernels) -> tight.
    def _q(t):
        return t.astype(jnp.bfloat16)

    def _ref_layer(A_c, X_c, W, b):
        xwb = (jnp.dot(X_c, _q(W), preferred_element_type=jnp.float32)
               + b).astype(jnp.bfloat16)
        y = jnp.dot(A_c, xwb, preferred_element_type=jnp.float32)
        return jnp.maximum(y, 0.0).astype(jnp.bfloat16)

    r1 = _ref_layer(_q(L_hgnn), _q(X), W1, b1)
    r2 = _ref_layer(_q(A_hgnnp), r1, W2, b2)
    r3 = _ref_layer(_q(A_hgnnp), r2, W3, b3)
    assert jnp.allclose(h, r2.astype(jnp.float32), atol=2e-2, rtol=2e-2), "h mismatch"
    assert jnp.allclose(logits, r3.astype(jnp.float32), atol=2e-2, rtol=2e-2), "logits mismatch"

    # (b) loose check against the pure-f32 math (bf16 rounding tolerance).
    f1 = jnp.maximum(L_hgnn @ (X @ W1 + b1), 0.0)
    f2 = jnp.maximum(A_hgnnp @ (f1 @ W2 + b2), 0.0)
    f3 = jnp.maximum(A_hgnnp @ (f2 @ W3 + b3), 0.0)
    assert jnp.allclose(h, f2, atol=1e-1, rtol=1e-1), "h far from f32 reference"
    assert jnp.allclose(logits, f3, atol=1e-1, rtol=1e-1), "logits far from f32 reference"

    print("KERNEL_OK")
</pallas_src>

<mosaic_0001>
module attributes {stable_mosaic.version = 11 : i64} {
  func.func @_theta_kernel(%arg0: i32, %arg1: memref<128x128xbf16, #tpu.memory_space<vmem>>, %arg2: memref<128x128xbf16, #tpu.memory_space<vmem>>, %arg3: memref<1x128xf32, #tpu.memory_space<vmem>>, %arg4: memref<128x128xbf16, #tpu.memory_space<vmem>>) attributes {dimension_semantics = [#tpu.dimension_semantics<parallel>], iteration_bounds = array<i64: 1>, scalar_prefetch = 0 : i64, scratch_operands = 0 : i64, tpu.core_type = #tpu.core_type<tc>, window_params = [{transform_indices = @transform_0, window_bounds = array<i64: 128, 128>}, {pipeline_mode = #tpu.pipeline_mode<synchronous>, transform_indices = @transform_1, window_bounds = array<i64: 128, 128>}, {pipeline_mode = #tpu.pipeline_mode<synchronous>, transform_indices = @transform_2, window_bounds = array<i64: 1, 128>}, {transform_indices = @transform_3, window_bounds = array<i64: 128, 128>}]} {
    %c0 = arith.constant 0 : index
    %c0_0 = arith.constant 0 : index
    %0 = vector.load %arg1[%c0, %c0_0] : memref<128x128xbf16, #tpu.memory_space<vmem>>, vector<128x128xbf16>
    %c0_1 = arith.constant 0 : index
    %c0_2 = arith.constant 0 : index
    %1 = vector.load %arg2[%c0_1, %c0_2] : memref<128x128xbf16, #tpu.memory_space<vmem>>, vector<128x128xbf16>
    %cst = arith.constant dense<0.000000e+00> : vector<128x128xf32>
    %2 = tpu.matmul %0, %1, %cst {dimension_numbers = #tpu.dot_dimension_numbers<[1], [0], [0], [1], [0, 0, 1, 1], [], []>} : vector<128x128xbf16>, vector<128x128xbf16>, vector<128x128xf32> -> vector<128x128xf32>
    %c0_3 = arith.constant 0 : index
    %c0_4 = arith.constant 0 : index
    %3 = vector.load %arg3[%c0_3, %c0_4] : memref<1x128xf32, #tpu.memory_space<vmem>>, vector<1x128xf32>
    %4 = vector.broadcast %3 : vector<1x128xf32> to vector<128x128xf32>
    %5 = arith.addf %2, %4 : vector<128x128xf32>
    %6 = arith.truncf %5 : vector<128x128xf32> to vector<128x128xbf16>
    %c0_5 = arith.constant 0 : index
    %c0_6 = arith.constant 0 : index
    %7 = vector.load %arg4[%c0_5, %c0_6] : memref<128x128xbf16, #tpu.memory_space<vmem>>, vector<128x128xbf16>
    tpu.vector_store %arg4[%c0_5, %c0_6], %6 {strides = array<i32>} : memref<128x128xbf16, #tpu.memory_space<vmem>>, vector<128x128xbf16>,
    return
  }
  func.func @transform_0(%arg0: i32) -> (i32, i32) {
    %c0_i32 = arith.constant 0 : i32
    %c0_i32_0 = arith.constant 0 : i32
    return %arg0, %c0_i32 : i32, i32
  }
  func.func @transform_1(%arg0: i32) -> (i32, i32) {
    %c0_i32 = arith.constant 0 : i32
    %c0_i32_0 = arith.constant 0 : i32
    %c0_i32_1 = arith.constant 0 : i32
    return %c0_i32, %c0_i32_0 : i32, i32
  }
  func.func @transform_2(%arg0: i32) -> (i32, i32) {
    %c0_i32 = arith.constant 0 : i32
    %c0_i32_0 = arith.constant 0 : i32
    %c0_i32_1 = arith.constant 0 : i32
    return %c0_i32, %c0_i32_0 : i32, i32
  }
  func.func @transform_3(%arg0: i32) -> (i32, i32) {
    %c0_i32 = arith.constant 0 : i32
    %c0_i32_0 = arith.constant 0 : i32
    return %arg0, %c0_i32 : i32, i32
  }
}

module attributes {stable_mosaic.version = 11 : i64} {
  func.func @_prop_theta_kernel(%arg0: i32, %arg1: i32, %arg2: memref<128x128xbf16, #tpu.memory_space<vmem>>, %arg3: memref<128x128xbf16, #tpu.memory_space<vmem>>, %arg4: memref<128x128xbf16, #tpu.memory_space<vmem>>, %arg5: memref<1x128xf32, #tpu.memory_space<vmem>>, %arg6: memref<128x128xbf16, #tpu.memory_space<vmem>>, %arg7: memref<128x128xbf16, #tpu.memory_space<vmem>>, %arg8: memref<128x128xf32, #tpu.memory_space<vmem>>) attributes {dimension_semantics = [#tpu.dimension_semantics<parallel>, #tpu.dimension_semantics<arbitrary>], iteration_bounds = array<i64: 1, 1>, scalar_prefetch = 0 : i64, scratch_operands = 1 : i64, tpu.core_type = #tpu.core_type<tc>, window_params = [{transform_indices = @transform_0, window_bounds = array<i64: 128, 128>}, {pipeline_mode = #tpu.pipeline_mode<synchronous>, transform_indices = @transform_1, window_bounds = array<i64: 128, 128>}, {pipeline_mode = #tpu.pipeline_mode<synchronous>, transform_indices = @transform_2, window_bounds = array<i64: 128, 128>}, {pipeline_mode = #tpu.pipeline_mode<synchronous>, transform_indices = @transform_3, window_bounds = array<i64: 1, 128>}, {transform_indices = @transform_4, window_bounds = array<i64: 128, 128>}, {transform_indices = @transform_5, window_bounds = array<i64: 128, 128>}]} {
    %c128_i32 = arith.constant 128 : i32
    %0 = arith.muli %arg1, %c128_i32 : i32
    %1 = tpu.assume_multiple %0, 128 : i32
    %2 = arith.index_cast %1 : i32 to index
    %c0 = arith.constant 0 : index
    %3 = vector.load %arg3[%2, %c0] : memref<128x128xbf16, #tpu.memory_space<vmem>>, vector<128x128xbf16>
    %c0_0 = arith.constant 0 : index
    %c0_1 = arith.constant 0 : index
    %4 = vector.load %arg2[%c0_0, %c0_1] : memref<128x128xbf16, #tpu.memory_space<vmem>>, vector<128x128xbf16>
    %cst = arith.constant dense<0.000000e+00> : vector<128x128xf32>
    %5 = tpu.matmul %4, %3, %cst {dimension_numbers = #tpu.dot_dimension_numbers<[1], [0], [0], [1], [0, 0, 1, 1], [], []>} : vector<128x128xbf16>, vector<128x128xbf16>, vector<128x128xf32> -> vector<128x128xf32>
    %c0_i32 = arith.constant 0 : i32
    %6 = arith.cmpi eq, %arg1, %c0_i32 : i32
    %7 = arith.extui %6 : i1 to i32
    %c0_i32_2 = arith.constant 0 : i32
    %8 = arith.cmpi ne, %7, %c0_i32_2 : i32
    scf.if %8 {
      %c0_7 = arith.constant 0 : index
      %c0_8 = arith.constant 0 : index
      %15 = vector.load %arg8[%c0_7, %c0_8] : memref<128x128xf32, #tpu.memory_space<vmem>>, vector<128x128xf32>
      tpu.vector_store %arg8[%c0_7, %c0_8], %5 {strides = array<i32>} : memref<128x128xf32, #tpu.memory_space<vmem>>, vector<128x128xf32>,
    } else {
    }
    %c0_i32_3 = arith.constant 0 : i32
    %9 = arith.cmpi sgt, %arg1, %c0_i32_3 : i32
    %10 = arith.extui %9 : i1 to i32
    %c0_i32_4 = arith.constant 0 : i32
    %11 = arith.cmpi ne, %10, %c0_i32_4 : i32
    scf.if %11 {
      %c0_7 = arith.constant 0 : index
      %c0_8 = arith.constant 0 : index
      %15 = vector.load %arg8[%c0_7, %c0_8] : memref<128x128xf32, #tpu.memory_space<vmem>>, vector<128x128xf32>
      %16 = arith.addf %15, %5 : vector<128x128xf32>
      %c0_9 = arith.constant 0 : index
      %c0_10 = arith.constant 0 : index
      %17 = vector.load %arg8[%c0_9, %c0_10] : memref<128x128xf32, #tpu.memory_space<vmem>>, vector<128x128xf32>
      tpu.vector_store %arg8[%c0_9, %c0_10], %16 {strides = array<i32>} : memref<128x128xf32, #tpu.memory_space<vmem>>, vector<128x128xf32>,
    } else {
    }
    %c0_i32_5 = arith.constant 0 : i32
    %12 = arith.cmpi eq, %arg1, %c0_i32_5 : i32
    %13 = arith.extui %12 : i1 to i32
    %c0_i32_6 = arith.constant 0 : i32
    %14 = arith.cmpi ne, %13, %c0_i32_6 : i32
    scf.if %14 {
      %c0_7 = arith.constant 0 : index
      %c0_8 = arith.constant 0 : index
      %15 = vector.load %arg8[%c0_7, %c0_8] : memref<128x128xf32, #tpu.memory_space<vmem>>, vector<128x128xf32>
      %cst_9 = arith.constant 0.000000e+00 : f32
      %16 = vector.broadcast %cst_9 : f32 to vector<128x128xf32>
      %17 = arith.maximumf %15, %16 : vector<128x128xf32>
      %18 = arith.truncf %17 : vector<128x128xf32> to vector<128x128xbf16>
      %c0_10 = arith.constant 0 : index
      %c0_11 = arith.constant 0 : index
      %19 = vector.load %arg6[%c0_10, %c0_11] : memref<128x128xbf16, #tpu.memory_space<vmem>>, vector<128x128xbf16>
      tpu.vector_store %arg6[%c0_10, %c0_11], %18 {strides = array<i32>} : memref<128x128xbf16, #tpu.memory_space<vmem>>, vector<128x128xbf16>,
      %20 = arith.truncf %17 : vector<128x128xf32> to vector<128x128xbf16>
      %c0_12 = arith.constant 0 : index
      %c0_13 = arith.constant 0 : index
      %21 = vector.load %arg4[%c0_12, %c0_13] : memref<128x128xbf16, #tpu.memory_space<vmem>>, vector<128x128xbf16>
      %cst_14 = arith.constant dense<0.000000e+00> : vector<128x128xf32>
      %22 = tpu.matmul %20, %21, %cst_14 {dimension_numbers = #tpu.dot_dimension_numbers<[1], [0], [0], [1], [0, 0, 1, 1], [], []>} : vector<128x128xbf16>, vector<128x128xbf16>, vector<128x128xf32> -> vector<128x128xf32>
      %c0_15 = arith.constant 0 : index
      %c0_16 = arith.constant 0 : index
      %23 = vector.load %arg5[%c0_15, %c0_16] : memref<1x128xf32, #tpu.memory_space<vmem>>, vector<1x128xf32>
      %24 = vector.broadcast %23 : vector<1x128xf32> to vector<128x128xf32>
      %25 = arith.addf %22, %24 : vector<128x128xf32>
      %26 = arith.truncf %25 : vector<128x128xf32> to vector<128x128xbf16>
      %c0_17 = arith.constant 0 : index
      %c0_18 = arith.constant 0 : index
      %27 = vector.load %arg7[%c0_17, %c0_18] : memref<128x128xbf16, #tpu.memory_space<vmem>>, vector<128x128xbf16>
      tpu.vector_store %arg7[%c0_17, %c0_18], %26 {strides = array<i32>} : memref<128x128xbf16, #tpu.memory_space<vmem>>, vector<128x128xbf16>,
    } else {
    }
    return
  }
  func.func @transform_0(%arg0: i32, %arg1: i32) -> (i32, i32) {
    %c0_i32 = arith.constant 0 : i32
    return %arg0, %arg1 : i32, i32
  }
  func.func @transform_1(%arg0: i32, %arg1: i32) -> (i32, i32) {
    %c0_i32 = arith.constant 0 : i32
    %c0_i32_0 = arith.constant 0 : i32
    %c0_i32_1 = arith.constant 0 : i32
    return %c0_i32, %c0_i32_0 : i32, i32
  }
  func.func @transform_2(%arg0: i32, %arg1: i32) -> (i32, i32) {
    %c0_i32 = arith.constant 0 : i32
    %c0_i32_0 = arith.constant 0 : i32
    %c0_i32_1 = arith.constant 0 : i32
    return %c0_i32, %c0_i32_0 : i32, i32
  }
  func.func @transform_3(%arg0: i32, %arg1: i32) -> (i32, i32) {
    %c0_i32 = arith.constant 0 : i32
    %c0_i32_0 = arith.constant 0 : i32
    %c0_i32_1 = arith.constant 0 : i32
    return %c0_i32, %c0_i32_0 : i32, i32
  }
  func.func @transform_4(%arg0: i32, %arg1: i32) -> (i32, i32) {
    %c0_i32 = arith.constant 0 : i32
    %c0_i32_0 = arith.constant 0 : i32
    return %arg0, %c0_i32 : i32, i32
  }
  func.func @transform_5(%arg0: i32, %arg1: i32) -> (i32, i32) {
    %c0_i32 = arith.constant 0 : i32
    %c0_i32_0 = arith.constant 0 : i32
    return %arg0, %c0_i32 : i32, i32
  }
}

module attributes {stable_mosaic.version = 11 : i64} {
  func.func @_prop_relu_kernel(%arg0: i32, %arg1: i32, %arg2: memref<128x128xbf16, #tpu.memory_space<vmem>>, %arg3: memref<128x128xbf16, #tpu.memory_space<vmem>>, %arg4: memref<128x128xbf16, #tpu.memory_space<vmem>>, %arg5: memref<128x128xf32, #tpu.memory_space<vmem>>) attributes {dimension_semantics = [#tpu.dimension_semantics<parallel>, #tpu.dimension_semantics<arbitrary>], iteration_bounds = array<i64: 1, 1>, scalar_prefetch = 0 : i64, scratch_operands = 1 : i64, tpu.core_type = #tpu.core_type<tc>, window_params = [{transform_indices = @transform_0, window_bounds = array<i64: 128, 128>}, {pipeline_mode = #tpu.pipeline_mode<synchronous>, transform_indices = @transform_1, window_bounds = array<i64: 128, 128>}, {transform_indices = @transform_2, window_bounds = array<i64: 128, 128>}]} {
    %c128_i32 = arith.constant 128 : i32
    %0 = arith.muli %arg1, %c128_i32 : i32
    %1 = tpu.assume_multiple %0, 128 : i32
    %2 = arith.index_cast %1 : i32 to index
    %c0 = arith.constant 0 : index
    %3 = vector.load %arg3[%2, %c0] : memref<128x128xbf16, #tpu.memory_space<vmem>>, vector<128x128xbf16>
    %c0_0 = arith.constant 0 : index
    %c0_1 = arith.constant 0 : index
    %4 = vector.load %arg2[%c0_0, %c0_1] : memref<128x128xbf16, #tpu.memory_space<vmem>>, vector<128x128xbf16>
    %cst = arith.constant dense<0.000000e+00> : vector<128x128xf32>
    %5 = tpu.matmul %4, %3, %cst {dimension_numbers = #tpu.dot_dimension_numbers<[1], [0], [0], [1], [0, 0, 1, 1], [], []>} : vector<128x128xbf16>, vector<128x128xbf16>, vector<128x128xf32> -> vector<128x128xf32>
    %c0_i32 = arith.constant 0 : i32
    %6 = arith.cmpi eq, %arg1, %c0_i32 : i32
    %7 = arith.extui %6 : i1 to i32
    %c0_i32_2 = arith.constant 0 : i32
    %8 = arith.cmpi ne, %7, %c0_i32_2 : i32
    scf.if %8 {
      %c0_7 = arith.constant 0 : index
      %c0_8 = arith.constant 0 : index
      %15 = vector.load %arg5[%c0_7, %c0_8] : memref<128x128xf32, #tpu.memory_space<vmem>>, vector<128x128xf32>
      tpu.vector_store %arg5[%c0_7, %c0_8], %5 {strides = array<i32>} : memref<128x128xf32, #tpu.memory_space<vmem>>, vector<128x128xf32>,
    } else {
    }
    %c0_i32_3 = arith.constant 0 : i32
    %9 = arith.cmpi sgt, %arg1, %c0_i32_3 : i32
    %10 = arith.extui %9 : i1 to i32
    %c0_i32_4 = arith.constant 0 : i32
    %11 = arith.cmpi ne, %10, %c0_i32_4 : i32
    scf.if %11 {
      %c0_7 = arith.constant 0 : index
      %c0_8 = arith.constant 0 : index
      %15 = vector.load %arg5[%c0_7, %c0_8] : memref<128x128xf32, #tpu.memory_space<vmem>>, vector<128x128xf32>
      %16 = arith.addf %15, %5 : vector<128x128xf32>
      %c0_9 = arith.constant 0 : index
      %c0_10 = arith.constant 0 : index
      %17 = vector.load %arg5[%c0_9, %c0_10] : memref<128x128xf32, #tpu.memory_space<vmem>>, vector<128x128xf32>
      tpu.vector_store %arg5[%c0_9, %c0_10], %16 {strides = array<i32>} : memref<128x128xf32, #tpu.memory_space<vmem>>, vector<128x128xf32>,
    } else {
    }
    %c0_i32_5 = arith.constant 0 : i32
    %12 = arith.cmpi eq, %arg1, %c0_i32_5 : i32
    %13 = arith.extui %12 : i1 to i32
    %c0_i32_6 = arith.constant 0 : i32
    %14 = arith.cmpi ne, %13, %c0_i32_6 : i32
    scf.if %14 {
      %c0_7 = arith.constant 0 : index
      %c0_8 = arith.constant 0 : index
      %15 = vector.load %arg5[%c0_7, %c0_8] : memref<128x128xf32, #tpu.memory_space<vmem>>, vector<128x128xf32>
      %cst_9 = arith.constant 0.000000e+00 : f32
      %16 = vector.broadcast %cst_9 : f32 to vector<128x128xf32>
      %17 = arith.maximumf %15, %16 : vector<128x128xf32>
      %18 = arith.truncf %17 : vector<128x128xf32> to vector<128x128xbf16>
      %c0_10 = arith.constant 0 : index
      %c0_11 = arith.constant 0 : index
      %19 = vector.load %arg4[%c0_10, %c0_11] : memref<128x128xbf16, #tpu.memory_space<vmem>>, vector<128x128xbf16>
      tpu.vector_store %arg4[%c0_10, %c0_11], %18 {strides = array<i32>} : memref<128x128xbf16, #tpu.memory_space<vmem>>, vector<128x128xbf16>,
    } else {
    }
    return
  }
  func.func @transform_0(%arg0: i32, %arg1: i32) -> (i32, i32) {
    %c0_i32 = arith.constant 0 : i32
    return %arg0, %arg1 : i32, i32
  }
  func.func @transform_1(%arg0: i32, %arg1: i32) -> (i32, i32) {
    %c0_i32 = arith.constant 0 : i32
    %c0_i32_0 = arith.constant 0 : i32
    %c0_i32_1 = arith.constant 0 : i32
    return %c0_i32, %c0_i32_0 : i32, i32
  }
  func.func @transform_2(%arg0: i32, %arg1: i32) -> (i32, i32) {
    %c0_i32 = arith.constant 0 : i32
    %c0_i32_0 = arith.constant 0 : i32
    return %arg0, %c0_i32 : i32, i32
  }
}

module attributes {stable_mosaic.version = 11 : i64} {
  func.func @_prop_theta_kernel(%arg0: i32, %arg1: i32, %arg2: memref<128x128xbf16, #tpu.memory_space<vmem>>, %arg3: memref<128x128xbf16, #tpu.memory_space<vmem>>, %arg4: memref<128x128xbf16, #tpu.memory_space<vmem>>, %arg5: memref<1x128xf32, #tpu.memory_space<vmem>>, %arg6: memref<128x128xbf16, #tpu.memory_space<vmem>>, %arg7: memref<128x128xbf16, #tpu.memory_space<vmem>>, %arg8: memref<128x128xf32, #tpu.memory_space<vmem>>) attributes {dimension_semantics = [#tpu.dimension_semantics<parallel>, #tpu.dimension_semantics<arbitrary>], iteration_bounds = array<i64: 1, 1>, scalar_prefetch = 0 : i64, scratch_operands = 1 : i64, tpu.core_type = #tpu.core_type<tc>, window_params = [{transform_indices = @transform_0, window_bounds = array<i64: 128, 128>}, {pipeline_mode = #tpu.pipeline_mode<synchronous>, transform_indices = @transform_1, window_bounds = array<i64: 128, 128>}, {pipeline_mode = #tpu.pipeline_mode<synchronous>, transform_indices = @transform_2, window_bounds = array<i64: 128, 128>}, {pipeline_mode = #tpu.pipeline_mode<synchronous>, transform_indices = @transform_3, window_bounds = array<i64: 1, 128>}, {transform_indices = @transform_4, window_bounds = array<i64: 128, 128>}, {transform_indices = @transform_5, window_bounds = array<i64: 128, 128>}]} {
    %c128_i32 = arith.constant 128 : i32
    %0 = arith.muli %arg1, %c128_i32 : i32
    %1 = tpu.assume_multiple %0, 128 : i32
    %2 = arith.index_cast %1 : i32 to index
    %c0 = arith.constant 0 : index
    %3 = vector.load %arg3[%2, %c0] : memref<128x128xbf16, #tpu.memory_space<vmem>>, vector<128x128xbf16>
    %c0_0 = arith.constant 0 : index
    %c0_1 = arith.constant 0 : index
    %4 = vector.load %arg2[%c0_0, %c0_1] : memref<128x128xbf16, #tpu.memory_space<vmem>>, vector<128x128xbf16>
    %cst = arith.constant dense<0.000000e+00> : vector<128x128xf32>
    %5 = tpu.matmul %4, %3, %cst {dimension_numbers = #tpu.dot_dimension_numbers<[1], [0], [0], [1], [0, 0, 1, 1], [], []>} : vector<128x128xbf16>, vector<128x128xbf16>, vector<128x128xf32> -> vector<128x128xf32>
    %c0_i32 = arith.constant 0 : i32
    %6 = arith.cmpi eq, %arg1, %c0_i32 : i32
    %7 = arith.extui %6 : i1 to i32
    %c0_i32_2 = arith.constant 0 : i32
    %8 = arith.cmpi ne, %7, %c0_i32_2 : i32
    scf.if %8 {
      %c0_7 = arith.constant 0 : index
      %c0_8 = arith.constant 0 : index
      %15 = vector.load %arg8[%c0_7, %c0_8] : memref<128x128xf32, #tpu.memory_space<vmem>>, vector<128x128xf32>
      tpu.vector_store %arg8[%c0_7, %c0_8], %5 {strides = array<i32>} : memref<128x128xf32, #tpu.memory_space<vmem>>, vector<128x128xf32>,
    } else {
    }
    %c0_i32_3 = arith.constant 0 : i32
    %9 = arith.cmpi sgt, %arg1, %c0_i32_3 : i32
    %10 = arith.extui %9 : i1 to i32
    %c0_i32_4 = arith.constant 0 : i32
    %11 = arith.cmpi ne, %10, %c0_i32_4 : i32
    scf.if %11 {
      %c0_7 = arith.constant 0 : index
      %c0_8 = arith.constant 0 : index
      %15 = vector.load %arg8[%c0_7, %c0_8] : memref<128x128xf32, #tpu.memory_space<vmem>>, vector<128x128xf32>
      %16 = arith.addf %15, %5 : vector<128x128xf32>
      %c0_9 = arith.constant 0 : index
      %c0_10 = arith.constant 0 : index
      %17 = vector.load %arg8[%c0_9, %c0_10] : memref<128x128xf32, #tpu.memory_space<vmem>>, vector<128x128xf32>
      tpu.vector_store %arg8[%c0_9, %c0_10], %16 {strides = array<i32>} : memref<128x128xf32, #tpu.memory_space<vmem>>, vector<128x128xf32>,
    } else {
    }
    %c0_i32_5 = arith.constant 0 : i32
    %12 = arith.cmpi eq, %arg1, %c0_i32_5 : i32
    %13 = arith.extui %12 : i1 to i32
    %c0_i32_6 = arith.constant 0 : i32
    %14 = arith.cmpi ne, %13, %c0_i32_6 : i32
    scf.if %14 {
      %c0_7 = arith.constant 0 : index
      %c0_8 = arith.constant 0 : index
      %15 = vector.load %arg8[%c0_7, %c0_8] : memref<128x128xf32, #tpu.memory_space<vmem>>, vector<128x128xf32>
      %cst_9 = arith.constant 0.000000e+00 : f32
      %16 = vector.broadcast %cst_9 : f32 to vector<128x128xf32>
      %17 = arith.maximumf %15, %16 : vector<128x128xf32>
      %18 = arith.truncf %17 : vector<128x128xf32> to vector<128x128xbf16>
      %c0_10 = arith.constant 0 : index
      %c0_11 = arith.constant 0 : index
      %19 = vector.load %arg6[%c0_10, %c0_11] : memref<128x128xbf16, #tpu.memory_space<vmem>>, vector<128x128xbf16>
      tpu.vector_store %arg6[%c0_10, %c0_11], %18 {strides = array<i32>} : memref<128x128xbf16, #tpu.memory_space<vmem>>, vector<128x128xbf16>,
      %20 = arith.truncf %17 : vector<128x128xf32> to vector<128x128xbf16>
      %c0_12 = arith.constant 0 : index
      %c0_13 = arith.constant 0 : index
      %21 = vector.load %arg4[%c0_12, %c0_13] : memref<128x128xbf16, #tpu.memory_space<vmem>>, vector<128x128xbf16>
      %cst_14 = arith.constant dense<0.000000e+00> : vector<128x128xf32>
      %22 = tpu.matmul %20, %21, %cst_14 {dimension_numbers = #tpu.dot_dimension_numbers<[1], [0], [0], [1], [0, 0, 1, 1], [], []>} : vector<128x128xbf16>, vector<128x128xbf16>, vector<128x128xf32> -> vector<128x128xf32>
      %c0_15 = arith.constant 0 : index
      %c0_16 = arith.constant 0 : index
      %23 = vector.load %arg5[%c0_15, %c0_16] : memref<1x128xf32, #tpu.memory_space<vmem>>, vector<1x128xf32>
      %24 = vector.broadcast %23 : vector<1x128xf32> to vector<128x128xf32>
      %25 = arith.addf %22, %24 : vector<128x128xf32>
      %26 = arith.truncf %25 : vector<128x128xf32> to vector<128x128xbf16>
      %c0_17 = arith.constant 0 : index
      %c0_18 = arith.constant 0 : index
      %27 = vector.load %arg7[%c0_17, %c0_18] : memref<128x128xbf16, #tpu.memory_space<vmem>>, vector<128x128xbf16>
      tpu.vector_store %arg7[%c0_17, %c0_18], %26 {strides = array<i32>} : memref<128x128xbf16, #tpu.memory_space<vmem>>, vector<128x128xbf16>,
    } else {
    }
    return
  }
  func.func @transform_0(%arg0: i32, %arg1: i32) -> (i32, i32) {
    %c0_i32 = arith.constant 0 : i32
    return %arg0, %arg1 : i32, i32
  }
  func.func @transform_1(%arg0: i32, %arg1: i32) -> (i32, i32) {
    %c0_i32 = arith.constant 0 : i32
    %c0_i32_0 = arith.constant 0 : i32
    %c0_i32_1 = arith.constant 0 : i32
    return %c0_i32, %c0_i32_0 : i32, i32
  }
  func.func @transform_2(%arg0: i32, %arg1: i32) -> (i32, i32) {
    %c0_i32 = arith.constant 0 : i32
    %c0_i32_0 = arith.constant 0 : i32
    %c0_i32_1 = arith.constant 0 : i32
    return %c0_i32, %c0_i32_0 : i32, i32
  }
  func.func @transform_3(%arg0: i32, %arg1: i32) -> (i32, i32) {
    %c0_i32 = arith.constant 0 : i32
    %c0_i32_0 = arith.constant 0 : i32
    %c0_i32_1 = arith.constant 0 : i32
    return %c0_i32, %c0_i32_0 : i32, i32
  }
  func.func @transform_4(%arg0: i32, %arg1: i32) -> (i32, i32) {
    %c0_i32 = arith.constant 0 : i32
    %c0_i32_0 = arith.constant 0 : i32
    return %arg0, %c0_i32 : i32, i32
  }
  func.func @transform_5(%arg0: i32, %arg1: i32) -> (i32, i32) {
    %c0_i32 = arith.constant 0 : i32
    %c0_i32_0 = arith.constant 0 : i32
    return %arg0, %c0_i32 : i32, i32
  }
}

</mosaic_0001>

<llo_original>
// kernel: gnn_hgnn_forward.4
$region0: #{gnn_hgnn_forward.4}
  #allocation0 [shape = 'u32[]', space=smem, size = 0x4, offset = 0x4, fixed_abs, tag = 'smem constant byte address 0x4 - core index']
  #allocation1 [shape = 'u32[72,128]{1,0:T(1,128)}', space=vmem, size = 0x9000, scoped, tag = 'internal scratch']
  %s0 = inlined_call_operand.vmem [shape: bf16[128,128], index: 0, kind: input, shape index: {}]
  %s1 = inlined_call_operand.vmem [shape: bf16[128,128], index: 1, kind: input, shape index: {}]
  %s2 = inlined_call_operand.vmem [shape: f32[1,128], index: 2, kind: input, shape index: {}]
  %s3 = inlined_call_operand.vmem [shape: bf16[128,128], index: 3, kind: output, shape index: {}]
  %s4 = sld [smem:[#allocation0]]
  $region22: #{gnn_hgnn_forward.4} parent=0
    _
  %s6 = ssub.s32 1, %s4
  %s7 = scalar_select 0, %s6, %s4
  // Predicated region
  $region2: #{gnn_hgnn_forward.4} parent=0 // pred_check
    _
  $region3: #{gnn_hgnn_forward.4} parent=0 // pred_check_branch
    %9 = sbr.rel (0) target = $region5
  $region4: #{gnn_hgnn_forward.4} parent=0 // pred_region
    _
  $region5: #{gnn_hgnn_forward.4} parent=0 // pred_fallthru
    _
  // Predicated region
  $region6: #{gnn_hgnn_forward.4} parent=0 // pred_check
    _
  $region7: #{gnn_hgnn_forward.4} parent=0 // pred_check_branch
    %11 = sbr.rel (0) target = $region9
  $region8: #{gnn_hgnn_forward.4} parent=0 // pred_region
    _
  $region9: #{gnn_hgnn_forward.4} parent=0 // pred_fallthru
    _
  // Predicated region
  $region10: #{gnn_hgnn_forward.4} parent=0 // pred_check
    _
  $region11: #{gnn_hgnn_forward.4} parent=0 // pred_check_branch
    %13 = sbr.rel (0) target = $region13
  $region12: #{gnn_hgnn_forward.4} parent=0 // pred_region
    _
  $region13: #{gnn_hgnn_forward.4} parent=0 // pred_fallthru
    _
  %v14 = vld [vmem:[%s0] sm:$0xf]
  %v15 = vld [vmem:[%s0 + $0x4] sm:$0xf]
  %v16 = vld [vmem:[%s0 + $0x8] sm:$0xf]
  %v17 = vld [vmem:[%s0 + $0xc] sm:$0xf]
  %v18 = vld [vmem:[%s0 + $0x10] sm:$0xf]
  %v19 = vld [vmem:[%s0 + $0x14] sm:$0xf]
  %v20 = vld [vmem:[%s0 + $0x18] sm:$0xf]
  %v21 = vld [vmem:[%s0 + $0x1c] sm:$0xf]
  %v22 = vld [vmem:[%s0 + $0x20] sm:$0xf]
  %v23 = vld [vmem:[%s0 + $0x24] sm:$0xf]
  %v24 = vld [vmem:[%s0 + $0x28] sm:$0xf]
  %v25 = vld [vmem:[%s0 + $0x2c] sm:$0xf]
  %v26 = vld [vmem:[%s0 + $0x30] sm:$0xf]
  %v27 = vld [vmem:[%s0 + $0x34] sm:$0xf]
  %v28 = vld [vmem:[%s0 + $0x38] sm:$0xf]
  %v29 = vld [vmem:[%s0 + $0x3c] sm:$0xf]
  %v30 = vld [vmem:[%s1] sm:$0xf]
  %v31 = vld [vmem:[%s1 + $0x4] sm:$0xf]
  %v32 = vld [vmem:[%s1 + $0x8] sm:$0xf]
  %v33 = vld [vmem:[%s1 + $0xc] sm:$0xf]
  %v34 = vld [vmem:[%s1 + $0x10] sm:$0xf]
  %v35 = vld [vmem:[%s1 + $0x14] sm:$0xf]
  %v36 = vld [vmem:[%s1 + $0x18] sm:$0xf]
  %v37 = vld [vmem:[%s1 + $0x1c] sm:$0xf]
  %v38 = vld [vmem:[%s1 + $0x20] sm:$0xf]
  %v39 = vld [vmem:[%s1 + $0x24] sm:$0xf]
  %v40 = vld [vmem:[%s1 + $0x28] sm:$0xf]
  %v41 = vld [vmem:[%s1 + $0x2c] sm:$0xf]
  %v42 = vld [vmem:[%s1 + $0x30] sm:$0xf]
  %v43 = vld [vmem:[%s1 + $0x34] sm:$0xf]
  %v44 = vld [vmem:[%s1 + $0x38] sm:$0xf]
  %v45 = vld [vmem:[%s1 + $0x3c] sm:$0xf]
  %v46 = vld [vmem:[%s2] sm:$0x1]
  %v48 = vperm.slane %v46, 0
  %v66 = vunpack.c.l.b16 %v14
  %v67 = vunpack.c.l.b16 %v15
  %v68 = vunpack.c.l.b16 %v16
  %v69 = vunpack.c.l.b16 %v17
  %v70 = vunpack.c.l.b16 %v18
  %v71 = vunpack.c.l.b16 %v19
  %v72 = vunpack.c.l.b16 %v20
  %v73 = vunpack.c.l.b16 %v21
  %v74 = vunpack.c.l.b16 %v22
  %v75 = vunpack.c.l.b16 %v23
  %v76 = vunpack.c.l.b16 %v24
  %v77 = vunpack.c.l.b16 %v25
  %v78 = vunpack.c.l.b16 %v26
  %v79 = vunpack.c.l.b16 %v27
  %v80 = vunpack.c.l.b16 %v28
  %v81 = vunpack.c.l.b16 %v29
  %v82 = vpack.c.b16 %v67, %v66
  %v83 = vpack.c.b16 %v69, %v68
  %v84 = vpack.c.b16 %v71, %v70
  %v85 = vpack.c.b16 %v73, %v72
  %v86 = vpack.c.b16 %v75, %v74
  %v87 = vpack.c.b16 %v77, %v76
  %v88 = vpack.c.b16 %v79, %v78
  %v89 = vpack.c.b16 %v81, %v80
  %v114 = vunpack.c.l.b16 %v30
  %v115 = vunpack.c.l.b16 %v31
  %v116 = vunpack.c.l.b16 %v32
  %v117 = vunpack.c.l.b16 %v33
  %v118 = vunpack.c.l.b16 %v34
  %v119 = vunpack.c.l.b16 %v35
  %v120 = vunpack.c.l.b16 %v36
  %v121 = vunpack.c.l.b16 %v37
  %v122 = vunpack.c.l.b16 %v38
  %v123 = vunpack.c.l.b16 %v39
  %v124 = vunpack.c.l.b16 %v40
  %v125 = vunpack.c.l.b16 %v41
  %v126 = vunpack.c.l.b16 %v42
  %v127 = vunpack.c.l.b16 %v43
  %v128 = vunpack.c.l.b16 %v44
  %v129 = vunpack.c.l.b16 %v45
  %v130 = vpack.c.b16 %v115, %v114
  %v131 = vpack.c.b16 %v117, %v116
  %v132 = vpack.c.b16 %v119, %v118
  %v133 = vpack.c.b16 %v121, %v120
  %v134 = vpack.c.b16 %v123, %v122
  %v135 = vpack.c.b16 %v125, %v124
  %v136 = vpack.c.b16 %v127, %v126
  %v137 = vpack.c.b16 %v129, %v128
  %146 = vmatpush.bf16.msra.mxu0 %v137
  %147 = vmatpush.bf16.msra.mxu0 %v136
  %148 = vmatpush.bf16.msra.mxu0 %v135
  %149 = vmatpush.bf16.msra.mxu0 %v134
  %150 = vmatpush.bf16.msra.mxu0 %v133
  %151 = vmatpush.bf16.msra.mxu0 %v132
  %152 = vmatpush.bf16.msra.mxu0 %v131
  %153 = vmatpush.bf16.msra.mxu0 %v130
  %154 = vmatmul.bf16.gmra.mxu0 %v82
  %v155 = vpop.f32.mrf.mxu0
  %v156 = vadd.f32 %v48, %v155
  %v157 = vpop.f32.mrf.mxu0
  %v158 = vadd.f32 %v48, %v157
  %159 = vmatmul.bf16.gmra.mxu0 %v83
  %v160 = vpop.f32.mrf.mxu0
  %v161 = vadd.f32 %v48, %v160
  %v162 = vpop.f32.mrf.mxu0
  %v163 = vadd.f32 %v48, %v162
  %164 = vmatmul.bf16.gmra.mxu0 %v84
  %v165 = vpop.f32.mrf.mxu0
  %v166 = vadd.f32 %v48, %v165
  %v167 = vpop.f32.mrf.mxu0
  %v168 = vadd.f32 %v48, %v167
  %169 = vmatmul.bf16.gmra.mxu0 %v85
  %v170 = vpop.f32.mrf.mxu0
  %v171 = vadd.f32 %v48, %v170
  %v172 = vpop.f32.mrf.mxu0
  %v173 = vadd.f32 %v48, %v172
  %174 = vmatmul.bf16.gmra.mxu0 %v86
  %v175 = vpop.f32.mrf.mxu0
  %v176 = vadd.f32 %v48, %v175
  %v177 = vpop.f32.mrf.mxu0
  %v178 = vadd.f32 %v48, %v177
  %179 = vmatmul.bf16.gmra.mxu0 %v87
  %v180 = vpop.f32.mrf.mxu0
  %v181 = vadd.f32 %v48, %v180
  %v182 = vpop.f32.mrf.mxu0
  %v183 = vadd.f32 %v48, %v182
  %184 = vmatmul.bf16.gmra.mxu0 %v88
  %v185 = vpop.f32.mrf.mxu0
  %v186 = vadd.f32 %v48, %v185
  %v187 = vpop.f32.mrf.mxu0
  %v188 = vadd.f32 %v48, %v187
  %189 = vmatmul.bf16.gmra.mxu0 %v89
  %v190 = vpop.f32.mrf.mxu0
  %v191 = vadd.f32 %v48, %v190
  %v192 = vpop.f32.mrf.mxu0
  %v193 = vadd.f32 %v48, %v192
  %194 = vdwg.mxu0
  %v195 = vpack.c.bf16 %v156, %v156
  %v196 = vpack.c.bf16 %v158, %v158
  %v197 = vpack.c.bf16 %v161, %v161
  %v198 = vpack.c.bf16 %v163, %v163
  %v199 = vpack.c.bf16 %v166, %v166
  %v200 = vpack.c.bf16 %v168, %v168
  %v201 = vpack.c.bf16 %v171, %v171
  %v202 = vpack.c.bf16 %v173, %v173
  %v203 = vpack.c.bf16 %v176, %v176
  %v204 = vpack.c.bf16 %v178, %v178
  %v205 = vpack.c.bf16 %v181, %v181
  %v206 = vpack.c.bf16 %v183, %v183
  %v207 = vpack.c.bf16 %v186, %v186
  %v208 = vpack.c.bf16 %v188, %v188
  %v209 = vpack.c.bf16 %v191, %v191
  %v210 = vpack.c.bf16 %v193, %v193
  %211 = vst [vmem:[%s3] sm:$0xf] %v195
  %212 = vst [vmem:[%s3 + $0x4] sm:$0xf] %v196
  %213 = vst [vmem:[%s3 + $0x8] sm:$0xf] %v197
  %214 = vst [vmem:[%s3 + $0xc] sm:$0xf] %v198
  %215 = vst [vmem:[%s3 + $0x10] sm:$0xf] %v199
  %216 = vst [vmem:[%s3 + $0x14] sm:$0xf] %v200
  %217 = vst [vmem:[%s3 + $0x18] sm:$0xf] %v201
  %218 = vst [vmem:[%s3 + $0x1c] sm:$0xf] %v202
  %219 = vst [vmem:[%s3 + $0x20] sm:$0xf] %v203
  %220 = vst [vmem:[%s3 + $0x24] sm:$0xf] %v204
  %221 = vst [vmem:[%s3 + $0x28] sm:$0xf] %v205
  %222 = vst [vmem:[%s3 + $0x2c] sm:$0xf] %v206
  %223 = vst [vmem:[%s3 + $0x30] sm:$0xf] %v207
  %224 = vst [vmem:[%s3 + $0x34] sm:$0xf] %v208
  %225 = vst [vmem:[%s3 + $0x38] sm:$0xf] %v209
  %226 = vst [vmem:[%s3 + $0x3c] sm:$0xf] %v210
  // Predicated region
  $region14: #{gnn_hgnn_forward.4} parent=0 // pred_check
    _
  $region15: #{gnn_hgnn_forward.4} parent=0 // pred_check_branch
    %228 = sbr.rel (0) target = $region17
  $region16: #{gnn_hgnn_forward.4} parent=0 // pred_region
    _
  $region17: #{gnn_hgnn_forward.4} parent=0 // pred_fallthru
    _
  // Predicated region
  $region18: #{gnn_hgnn_forward.4} parent=0 // pred_check
    _
  $region19: #{gnn_hgnn_forward.4} parent=0 // pred_check_branch
    %230 = sbr.rel (0) target = $region21
  $region20: #{gnn_hgnn_forward.4} parent=0 // pred_region
    _
  $region21: #{gnn_hgnn_forward.4} parent=0 // pred_fallthru
    _

// kernel: gnn_hgnn_forward.5
$region0: #{gnn_hgnn_forward.5}
  #allocation0 [shape = 'u32[]', space=smem, size = 0x4, offset = 0x4, fixed_abs, tag = 'smem constant byte address 0x4 - core index']
  #allocation1 [shape = 'u32[72,128]{1,0:T(1,128)}', space=vmem, size = 0x9000, scoped, tag = 'internal scratch']
  #allocation2 [shape = 'f32[128,128]{1,0:T(8,128)}', space=vmem, size = 0x10000, scoped, tag = 'scratch operand']
  %s0 = inlined_call_operand.vmem [shape: bf16[128,128], index: 0, kind: input, shape index: {}]
  %s1 = inlined_call_operand.vmem [shape: bf16[128,128], index: 1, kind: input, shape index: {}]
  %s2 = inlined_call_operand.vmem [shape: bf16[128,128], index: 2, kind: input, shape index: {}]
  %s3 = inlined_call_operand.vmem [shape: f32[1,128], index: 3, kind: input, shape index: {}]
  %s4 = inlined_call_operand.hbm [shape: bf16[128,128], index: 4, kind: output, shape index: {0}]
  %s5 = inlined_call_operand.vmem [shape: bf16[128,128], index: 5, kind: output, shape index: {1}]
  %6 = xla_tuple %s4, %s5
  %s7 = sld [smem:[#allocation0]]
  $region46: #{gnn_hgnn_forward.5} parent=0
    _
  %s9 = ssub.s32 1, %s7
  %s10 = scalar_select 0, %s9, %s7
  $region1: #{gnn_hgnn_forward.5} parent=0
    #allocation3 [shape = 'u8[32768]{0}', space=vmem, size = 0x8000, scoped, tag = 'output window, operand 0, single buffered']
    #allocation4 [shape = 's32[1]{0}', space=sflag, size = 0x4, scoped, tag = 'scoped memory for gnn_hgnn_forward.5']
    %11 = vsyncpa [#allocation4], 0
    // Predicated region
    $region2: #{gnn_hgnn_forward.5} parent=1 // pred_check
      _
    $region3: #{gnn_hgnn_forward.5} parent=1 // pred_check_branch
      %13 = sbr.rel (0) target = $region5
    $region4: #{gnn_hgnn_forward.5} parent=1 // pred_region
      _
    $region5: #{gnn_hgnn_forward.5} parent=1 // pred_fallthru
      _
    // Predicated region
    $region6: #{gnn_hgnn_forward.5} parent=1 // pred_check
      _
    $region7: #{gnn_hgnn_forward.5} parent=1 // pred_check_branch
      %15 = sbr.rel (0) target = $region9
    $region8: #{gnn_hgnn_forward.5} parent=1 // pred_region
      _
    $region9: #{gnn_hgnn_forward.5} parent=1 // pred_fallthru
      _
    // Predicated region
    $region10: #{gnn_hgnn_forward.5} parent=1 // pred_check
      _
    $region11: #{gnn_hgnn_forward.5} parent=1 // pred_check_branch
      %17 = sbr.rel (0) target = $region13
    $region12: #{gnn_hgnn_forward.5} parent=1 // pred_region
      _
    $region13: #{gnn_hgnn_forward.5} parent=1 // pred_fallthru
      _
    // Predicated region
    $region14: #{gnn_hgnn_forward.5} parent=1 // pred_check
      _
    $region15: #{gnn_hgnn_forward.5} parent=1 // pred_check_branch
      %19 = sbr.rel (0) target = $region17
    $region16: #{gnn_hgnn_forward.5} parent=1 // pred_region
      _
    $region17: #{gnn_hgnn_forward.5} parent=1 // pred_fallthru
      _
    %s20 = smul.u32 0, 128
    %s21 = sshra.s32 %s20, 3
    %s22 = sand.u32 %s20, 7
    %s23 = smul.addr %s21, 4
    %s24 = scalar_lea.vmem %s1, %s23
    %v25 = vld [vmem:[%s24] sm:$0xf]
    %v26 = vld [vmem:[%s24 + $0x4] sm:$0xf]
    %v27 = vld [vmem:[%s24 + $0x8] sm:$0xf]
    %v28 = vld [vmem:[%s24 + $0xc] sm:$0xf]
    %v29 = vld [vmem:[%s24 + $0x10] sm:$0xf]
    %v30 = vld [vmem:[%s24 + $0x14] sm:$0xf]
    %v31 = vld [vmem:[%s24 + $0x18] sm:$0xf]
    %v32 = vld [vmem:[%s24 + $0x1c] sm:$0xf]
    %v33 = vld [vmem:[%s24 + $0x20] sm:$0xf]
    %v34 = vld [vmem:[%s24 + $0x24] sm:$0xf]
    %v35 = vld [vmem:[%s24 + $0x28] sm:$0xf]
    %v36 = vld [vmem:[%s24 + $0x2c] sm:$0xf]
    %v37 = vld [vmem:[%s24 + $0x30] sm:$0xf]
    %v38 = vld [vmem:[%s24 + $0x34] sm:$0xf]
    %v39 = vld [vmem:[%s24 + $0x38] sm:$0xf]
    %v40 = vld [vmem:[%s24 + $0x3c] sm:$0xf]
    %v41 = vld [vmem:[%s0] sm:$0xf]
    %v42 = vld [vmem:[%s0 + $0x4] sm:$0xf]
    %v43 = vld [vmem:[%s0 + $0x8] sm:$0xf]
    %v44 = vld [vmem:[%s0 + $0xc] sm:$0xf]
    %v45 = vld [vmem:[%s0 + $0x10] sm:$0xf]
    %v46 = vld [vmem:[%s0 + $0x14] sm:$0xf]
    %v47 = vld [vmem:[%s0 + $0x18] sm:$0xf]
    %v48 = vld [vmem:[%s0 + $0x1c] sm:$0xf]
    %v49 = vld [vmem:[%s0 + $0x20] sm:$0xf]
    %v50 = vld [vmem:[%s0 + $0x24] sm:$0xf]
    %v51 = vld [vmem:[%s0 + $0x28] sm:$0xf]
    %v52 = vld [vmem:[%s0 + $0x2c] sm:$0xf]
    %v53 = vld [vmem:[%s0 + $0x30] sm:$0xf]
    %v54 = vld [vmem:[%s0 + $0x34] sm:$0xf]
    %v55 = vld [vmem:[%s0 + $0x38] sm:$0xf]
    %v56 = vld [vmem:[%s0 + $0x3c] sm:$0xf]
    %v73 = vunpack.c.l.b16 %v41
    %v74 = vunpack.c.l.b16 %v42
    %v75 = vunpack.c.l.b16 %v43
    %v76 = vunpack.c.l.b16 %v44
    %v77 = vunpack.c.l.b16 %v45
    %v78 = vunpack.c.l.b16 %v46
    %v79 = vunpack.c.l.b16 %v47
    %v80 = vunpack.c.l.b16 %v48
    %v81 = vunpack.c.l.b16 %v49
    %v82 = vunpack.c.l.b16 %v50
    %v83 = vunpack.c.l.b16 %v51
    %v84 = vunpack.c.l.b16 %v52
    %v85 = vunpack.c.l.b16 %v53
    %v86 = vunpack.c.l.b16 %v54
    %v87 = vunpack.c.l.b16 %v55
    %v88 = vunpack.c.l.b16 %v56
    %v89 = vpack.c.b16 %v74, %v73
    %v90 = vpack.c.b16 %v76, %v75
    %v91 = vpack.c.b16 %v78, %v77
    %v92 = vpack.c.b16 %v80, %v79
    %v93 = vpack.c.b16 %v82, %v81
    %v94 = vpack.c.b16 %v84, %v83
    %v95 = vpack.c.b16 %v86, %v85
    %v96 = vpack.c.b16 %v88, %v87
    %v121 = vunpack.c.l.b16 %v25
    %v122 = vunpack.c.l.b16 %v26
    %v123 = vunpack.c.l.b16 %v27
    %v124 = vunpack.c.l.b16 %v28
    %v125 = vunpack.c.l.b16 %v29
    %v126 = vunpack.c.l.b16 %v30
    %v127 = vunpack.c.l.b16 %v31
    %v128 = vunpack.c.l.b16 %v32
    %v129 = vunpack.c.l.b16 %v33
    %v130 = vunpack.c.l.b16 %v34
    %v131 = vunpack.c.l.b16 %v35
    %v132 = vunpack.c.l.b16 %v36
    %v133 = vunpack.c.l.b16 %v37
    %v134 = vunpack.c.l.b16 %v38
    %v135 = vunpack.c.l.b16 %v39
    %v136 = vunpack.c.l.b16 %v40
    %v137 = vpack.c.b16 %v122, %v121
    %v138 = vpack.c.b16 %v124, %v123
    %v139 = vpack.c.b16 %v126, %v125
    %v140 = vpack.c.b16 %v128, %v127
    %v141 = vpack.c.b16 %v130, %v129
    %v142 = vpack.c.b16 %v132, %v131
    %v143 = vpack.c.b16 %v134, %v133
    %v144 = vpack.c.b16 %v136, %v135
    %153 = vmatpush.bf16.msra.mxu0 %v144
    %154 = vmatpush.bf16.msra.mxu0 %v143
    %155 = vmatpush.bf16.msra.mxu0 %v142
    %156 = vmatpush.bf16.msra.mxu0 %v141
    %157 = vmatpush.bf16.msra.mxu0 %v140
    %158 = vmatpush.bf16.msra.mxu0 %v139
    %159 = vmatpush.bf16.msra.mxu0 %v138
    %160 = vmatpush.bf16.msra.mxu0 %v137
    %161 = vmatmul.bf16.gmra.mxu0 %v89
    %v162 = vpop.f32.mrf.mxu0
    %v163 = vadd.f32 0.0, %v162
    %v164 = vpop.f32.mrf.mxu0
    %v165 = vadd.f32 0.0, %v164
    %166 = vmatmul.bf16.gmra.mxu0 %v90
    %v167 = vpop.f32.mrf.mxu0
    %v168 = vadd.f32 0.0, %v167
    %v169 = vpop.f32.mrf.mxu0
    %v170 = vadd.f32 0.0, %v169
    %171 = vmatmul.bf16.gmra.mxu0 %v91
    %v172 = vpop.f32.mrf.mxu0
    %v173 = vadd.f32 0.0, %v172
    %v174 = vpop.f32.mrf.mxu0
    %v175 = vadd.f32 0.0, %v174
    %176 = vmatmul.bf16.gmra.mxu0 %v92
    %v177 = vpop.f32.mrf.mxu0
    %v178 = vadd.f32 0.0, %v177
    %v179 = vpop.f32.mrf.mxu0
    %v180 = vadd.f32 0.0, %v179
    %181 = vmatmul.bf16.gmra.mxu0 %v93
    %v182 = vpop.f32.mrf.mxu0
    %v183 = vadd.f32 0.0, %v182
    %v184 = vpop.f32.mrf.mxu0
    %v185 = vadd.f32 0.0, %v184
    %186 = vmatmul.bf16.gmra.mxu0 %v94
    %v187 = vpop.f32.mrf.mxu0
    %v188 = vadd.f32 0.0, %v187
    %v189 = vpop.f32.mrf.mxu0
    %v190 = vadd.f32 0.0, %v189
    %191 = vmatmul.bf16.gmra.mxu0 %v95
    %v192 = vpop.f32.mrf.mxu0
    %v193 = vadd.f32 0.0, %v192
    %v194 = vpop.f32.mrf.mxu0
    %v195 = vadd.f32 0.0, %v194
    %196 = vmatmul.bf16.gmra.mxu0 %v96
    %v197 = vpop.f32.mrf.mxu0
    %v198 = vadd.f32 0.0, %v197
    %v199 = vpop.f32.mrf.mxu0
    %v200 = vadd.f32 0.0, %v199
    %201 = vdwg.mxu0
    %p202 = scmp.eq.s32.totalorder 0, 0
    // Predicated region
    $region18: #{gnn_hgnn_forward.5} parent=1 // pred_check
      %p203 = pneg %p202
    $region19: #{gnn_hgnn_forward.5} parent=1 // pred_check_branch
      %205 = sbr.rel (%p203) target = $region21
    $region20: #{gnn_hgnn_forward.5} parent=1 // pred_region
      %206 = vst [vmem:[#allocation2] sm:$0xff] %v163
      %207 = vst [vmem:[#allocation2 + $0x8] sm:$0xff] %v165
      %208 = vst [vmem:[#allocation2 + $0x10] sm:$0xff] %v168
      %209 = vst [vmem:[#allocation2 + $0x18] sm:$0xff] %v170
      %210 = vst [vmem:[#allocation2 + $0x20] sm:$0xff] %v173
      %211 = vst [vmem:[#allocation2 + $0x28] sm:$0xff] %v175
      %212 = vst [vmem:[#allocation2 + $0x30] sm:$0xff] %v178
      %213 = vst [vmem:[#allocation2 + $0x38] sm:$0xff] %v180
      %214 = vst [vmem:[#allocation2 + $0x40] sm:$0xff] %v183
      %215 = vst [vmem:[#allocation2 + $0x48] sm:$0xff] %v185
      %216 = vst [vmem:[#allocation2 + $0x50] sm:$0xff] %v188
      %217 = vst [vmem:[#allocation2 + $0x58] sm:$0xff] %v190
      %218 = vst [vmem:[#allocation2 + $0x60] sm:$0xff] %v193
      %219 = vst [vmem:[#allocation2 + $0x68] sm:$0xff] %v195
      %220 = vst [vmem:[#allocation2 + $0x70] sm:$0xff] %v198
      %221 = vst [vmem:[#allocation2 + $0x78] sm:$0xff] %v200
    $region21: #{gnn_hgnn_forward.5} parent=1 // pred_fallthru
      _
    %p222 = scmp.gt.s32.totalorder 0, 0
    // Predicated region
    $region22: #{gnn_hgnn_forward.5} parent=1 // pred_check
      %p223 = pneg %p222
    $region23: #{gnn_hgnn_forward.5} parent=1 // pred_check_branch
      %225 = sbr.rel (%p223) target = $region25
    $region24: #{gnn_hgnn_forward.5} parent=1 // pred_region
      %v226 = vld [vmem:[#allocation2] sm:$0xff]
      %v227 = vld [vmem:[#allocation2 + $0x8] sm:$0xff]
      %v228 = vld [vmem:[#allocation2 + $0x10] sm:$0xff]
      %v229 = vld [vmem:[#allocation2 + $0x18] sm:$0xff]
      %v230 = vld [vmem:[#allocation2 + $0x20] sm:$0xff]
      %v231 = vld [vmem:[#allocation2 + $0x28] sm:$0xff]
      %v232 = vld [vmem:[#allocation2 + $0x30] sm:$0xff]
      %v233 = vld [vmem:[#allocation2 + $0x38] sm:$0xff]
      %v234 = vld [vmem:[#allocation2 + $0x40] sm:$0xff]
      %v235 = vld [vmem:[#allocation2 + $0x48] sm:$0xff]
      %v236 = vld [vmem:[#allocation2 + $0x50] sm:$0xff]
      %v237 = vld [vmem:[#allocation2 + $0x58] sm:$0xff]
      %v238 = vld [vmem:[#allocation2 + $0x60] sm:$0xff]
      %v239 = vld [vmem:[#allocation2 + $0x68] sm:$0xff]
      %v240 = vld [vmem:[#allocation2 + $0x70] sm:$0xff]
      %v241 = vld [vmem:[#allocation2 + $0x78] sm:$0xff]
      %v242 = vadd.f32 %v226, %v163
      %v243 = vadd.f32 %v227, %v165
      %v244 = vadd.f32 %v228, %v168
      %v245 = vadd.f32 %v229, %v170
      %v246 = vadd.f32 %v230, %v173
      %v247 = vadd.f32 %v231, %v175
      %v248 = vadd.f32 %v232, %v178
      %v249 = vadd.f32 %v233, %v180
      %v250 = vadd.f32 %v234, %v183
      %v251 = vadd.f32 %v235, %v185
      %v252 = vadd.f32 %v236, %v188
      %v253 = vadd.f32 %v237, %v190
      %v254 = vadd.f32 %v238, %v193
      %v255 = vadd.f32 %v239, %v195
      %v256 = vadd.f32 %v240, %v198
      %v257 = vadd.f32 %v241, %v200
      %258 = vst [vmem:[#allocation2] sm:$0xff] %v242
      %259 = vst [vmem:[#allocation2 + $0x8] sm:$0xff] %v243
      %260 = vst [vmem:[#allocation2 + $0x10] sm:$0xff] %v244
      %261 = vst [vmem:[#allocation2 + $0x18] sm:$0xff] %v245
      %262 = vst [vmem:[#allocation2 + $0x20] sm:$0xff] %v246
      %263 = vst [vmem:[#allocation2 + $0x28] sm:$0xff] %v247
      %264 = vst [vmem:[#allocation2 + $0x30] sm:$0xff] %v248
      %265 = vst [vmem:[#allocation2 + $0x38] sm:$0xff] %v249
      %266 = vst [vmem:[#allocation2 + $0x40] sm:$0xff] %v250
      %267 = vst [vmem:[#allocation2 + $0x48] sm:$0xff] %v251
      %268 = vst [vmem:[#allocation2 + $0x50] sm:$0xff] %v252
      %269 = vst [vmem:[#allocation2 + $0x58] sm:$0xff] %v253
      %270 = vst [vmem:[#allocation2 + $0x60] sm:$0xff] %v254
      %271 = vst [vmem:[#allocation2 + $0x68] sm:$0xff] %v255
      %272 = vst [vmem:[#allocation2 + $0x70] sm:$0xff] %v256
      %273 = vst [vmem:[#allocation2 + $0x78] sm:$0xff] %v257
    $region25: #{gnn_hgnn_forward.5} parent=1 // pred_fallthru
      _
    // Predicated region
    $region26: #{gnn_hgnn_forward.5} parent=1 // pred_check
      %p274 = pneg %p202
    $region27: #{gnn_hgnn_forward.5} parent=1 // pred_check_branch
      %276 = sbr.rel (%p274) target = $region29
    $region28: #{gnn_hgnn_forward.5} parent=1 // pred_region
      %v277 = vld [vmem:[#allocation2] sm:$0xff]
      %v278 = vld [vmem:[#allocation2 + $0x8] sm:$0xff]
      %v279 = vld [vmem:[#allocation2 + $0x10] sm:$0xff]
      %v280 = vld [vmem:[#allocation2 + $0x18] sm:$0xff]
      %v281 = vld [vmem:[#allocation2 + $0x20] sm:$0xff]
      %v282 = vld [vmem:[#allocation2 + $0x28] sm:$0xff]
      %v283 = vld [vmem:[#allocation2 + $0x30] sm:$0xff]
      %v284 = vld [vmem:[#allocation2 + $0x38] sm:$0xff]
      %v285 = vld [vmem:[#allocation2 + $0x40] sm:$0xff]
      %v286 = vld [vmem:[#allocation2 + $0x48] sm:$0xff]
      %v287 = vld [vmem:[#allocation2 + $0x50] sm:$0xff]
      %v288 = vld [vmem:[#allocation2 + $0x58] sm:$0xff]
      %v289 = vld [vmem:[#allocation2 + $0x60] sm:$0xff]
      %v290 = vld [vmem:[#allocation2 + $0x68] sm:$0xff]
      %v291 = vld [vmem:[#allocation2 + $0x70] sm:$0xff]
      %v292 = vld [vmem:[#allocation2 + $0x78] sm:$0xff]
      %v293 = vmax.f32 %v277, 0.0
      %v294 = vmax.f32 %v278, 0.0
      %v295 = vmax.f32 %v279, 0.0
      %v296 = vmax.f32 %v280, 0.0
      %v297 = vmax.f32 %v281, 0.0
      %v298 = vmax.f32 %v282, 0.0
      %v299 = vmax.f32 %v283, 0.0
      %v300 = vmax.f32 %v284, 0.0
      %v301 = vmax.f32 %v285, 0.0
      %v302 = vmax.f32 %v286, 0.0
      %v303 = vmax.f32 %v287, 0.0
      %v304 = vmax.f32 %v288, 0.0
      %v305 = vmax.f32 %v289, 0.0
      %v306 = vmax.f32 %v290, 0.0
      %v307 = vmax.f32 %v291, 0.0
      %v308 = vmax.f32 %v292, 0.0
      %v309 = vpack.c.bf16 %v293, %v293
      %v310 = vpack.c.bf16 %v294, %v294
      %v311 = vpack.c.bf16 %v295, %v295
      %v312 = vpack.c.bf16 %v296, %v296
      %v313 = vpack.c.bf16 %v297, %v297
      %v314 = vpack.c.bf16 %v298, %v298
      %v315 = vpack.c.bf16 %v299, %v299
      %v316 = vpack.c.bf16 %v300, %v300
      %v317 = vpack.c.bf16 %v301, %v301
      %v318 = vpack.c.bf16 %v302, %v302
      %v319 = vpack.c.bf16 %v303, %v303
      %v320 = vpack.c.bf16 %v304, %v304
      %v321 = vpack.c.bf16 %v305, %v305
      %v322 = vpack.c.bf16 %v306, %v306
      %v323 = vpack.c.bf16 %v307, %v307
      %v324 = vpack.c.bf16 %v308, %v308
      %325 = vst [vmem:[#allocation3] sm:$0xf] %v309
      %326 = vst [vmem:[#allocation3 + $0x4] sm:$0xf] %v310
      %327 = vst [vmem:[#allocation3 + $0x8] sm:$0xf] %v311
      %328 = vst [vmem:[#allocation3 + $0xc] sm:$0xf] %v312
      %329 = vst [vmem:[#allocation3 + $0x10] sm:$0xf] %v313
      %330 = vst [vmem:[#allocation3 + $0x14] sm:$0xf] %v314
      %331 = vst [vmem:[#allocation3 + $0x18] sm:$0xf] %v315
      %332 = vst [vmem:[#allocation3 + $0x1c] sm:$0xf] %v316
      %333 = vst [vmem:[#allocation3 + $0x20] sm:$0xf] %v317
      %334 = vst [vmem:[#allocation3 + $0x24] sm:$0xf] %v318
      %335 = vst [vmem:[#allocation3 + $0x28] sm:$0xf] %v319
      %336 = vst [vmem:[#allocation3 + $0x2c] sm:$0xf] %v320
      %337 = vst [vmem:[#allocation3 + $0x30] sm:$0xf] %v321
      %338 = vst [vmem:[#allocation3 + $0x34] sm:$0xf] %v322
      %339 = vst [vmem:[#allocation3 + $0x38] sm:$0xf] %v323
      %340 = vst [vmem:[#allocation3 + $0x3c] sm:$0xf] %v324
      %v341 = vld [vmem:[%s2] sm:$0xf]
      %v342 = vld [vmem:[%s2 + $0x4] sm:$0xf]
      %v343 = vld [vmem:[%s2 + $0x8] sm:$0xf]
      %v344 = vld [vmem:[%s2 + $0xc] sm:$0xf]
      %v345 = vld [vmem:[%s2 + $0x10] sm:$0xf]
      %v346 = vld [vmem:[%s2 + $0x14] sm:$0xf]
      %v347 = vld [vmem:[%s2 + $0x18] sm:$0xf]
      %v348 = vld [vmem:[%s2 + $0x1c] sm:$0xf]
      %v349 = vld [vmem:[%s2 + $0x20] sm:$0xf]
      %v350 = vld [vmem:[%s2 + $0x24] sm:$0xf]
      %v351 = vld [vmem:[%s2 + $0x28] sm:$0xf]
      %v352 = vld [vmem:[%s2 + $0x2c] sm:$0xf]
      %v353 = vld [vmem:[%s2 + $0x30] sm:$0xf]
      %v354 = vld [vmem:[%s2 + $0x34] sm:$0xf]
      %v355 = vld [vmem:[%s2 + $0x38] sm:$0xf]
      %v356 = vld [vmem:[%s2 + $0x3c] sm:$0xf]
      %v357 = vld [vmem:[%s3] sm:$0x1]
      %v359 = vperm.slane %v357, 0
      %v377 = vunpack.c.l.b16 %v309
      %v378 = vunpack.c.l.b16 %v310
      %v379 = vunpack.c.l.b16 %v311
      %v380 = vunpack.c.l.b16 %v312
      %v381 = vunpack.c.l.b16 %v313
      %v382 = vunpack.c.l.b16 %v314
      %v383 = vunpack.c.l.b16 %v315
      %v384 = vunpack.c.l.b16 %v316
      %v385 = vunpack.c.l.b16 %v317
      %v386 = vunpack.c.l.b16 %v318
      %v387 = vunpack.c.l.b16 %v319
      %v388 = vunpack.c.l.b16 %v320
      %v389 = vunpack.c.l.b16 %v321
      %v390 = vunpack.c.l.b16 %v322
      %v391 = vunpack.c.l.b16 %v323
      %v392 = vunpack.c.l.b16 %v324
      %v393 = vpack.c.b16 %v378, %v377
      %v394 = vpack.c.b16 %v380, %v379
      %v395 = vpack.c.b16 %v382, %v381
      %v396 = vpack.c.b16 %v384, %v383
      %v397 = vpack.c.b16 %v386, %v385
      %v398 = vpack.c.b16 %v388, %v387
      %v399 = vpack.c.b16 %v390, %v389
      %v400 = vpack.c.b16 %v392, %v391
      %v425 = vunpack.c.l.b16 %v341
      %v426 = vunpack.c.l.b16 %v342
      %v427 = vunpack.c.l.b16 %v343
      %v428 = vunpack.c.l.b16 %v344
      %v429 = vunpack.c.l.b16 %v345
      %v430 = vunpack.c.l.b16 %v346
      %v431 = vunpack.c.l.b16 %v347
      %v432 = vunpack.c.l.b16 %v348
      %v433 = vunpack.c.l.b16 %v349
      %v434 = vunpack.c.l.b16 %v350
      %v435 = vunpack.c.l.b16 %v351
      %v436 = vunpack.c.l.b16 %v352
      %v437 = vunpack.c.l.b16 %v353
      %v438 = vunpack.c.l.b16 %v354
      %v439 = vunpack.c.l.b16 %v355
      %v440 = vunpack.c.l.b16 %v356
      %v441 = vpack.c.b16 %v426, %v425
      %v442 = vpack.c.b16 %v428, %v427
      %v443 = vpack.c.b16 %v430, %v429
      %v444 = vpack.c.b16 %v432, %v431
      %v445 = vpack.c.b16 %v434, %v433
      %v446 = vpack.c.b16 %v436, %v435
      %v447 = vpack.c.b16 %v438, %v437
      %v448 = vpack.c.b16 %v440, %v439
      %457 = vmatpush.bf16.msra.mxu0 %v448
      %458 = vmatpush.bf16.msra.mxu0 %v447
      %459 = vmatpush.bf16.msra.mxu0 %v446
      %460 = vmatpush.bf16.msra.mxu0 %v445
      %461 = vmatpush.bf16.msra.mxu0 %v444
      %462 = vmatpush.bf16.msra.mxu0 %v443
      %463 = vmatpush.bf16.msra.mxu0 %v442
      %464 = vmatpush.bf16.msra.mxu0 %v441
      %465 = vmatmul.bf16.gmra.mxu0 %v393
      %v466 = vpop.f32.mrf.mxu0
      %v467 = vadd.f32 %v359, %v466
      %v468 = vpop.f32.mrf.mxu0
      %v469 = vadd.f32 %v359, %v468
      %470 = vmatmul.bf16.gmra.mxu0 %v394
      %v471 = vpop.f32.mrf.mxu0
      %v472 = vadd.f32 %v359, %v471
      %v473 = vpop.f32.mrf.mxu0
      %v474 = vadd.f32 %v359, %v473
      %475 = vmatmul.bf16.gmra.mxu0 %v395
      %v476 = vpop.f32.mrf.mxu0
      %v477 = vadd.f32 %v359, %v476
      %v478 = vpop.f32.mrf.mxu0
      %v479 = vadd.f32 %v359, %v478
      %480 = vmatmul.bf16.gmra.mxu0 %v396
      %v481 = vpop.f32.mrf.mxu0
      %v482 = vadd.f32 %v359, %v481
      %v483 = vpop.f32.mrf.mxu0
      %v484 = vadd.f32 %v359, %v483
      %485 = vmatmul.bf16.gmra.mxu0 %v397
      %v486 = vpop.f32.mrf.mxu0
      %v487 = vadd.f32 %v359, %v486
      %v488 = vpop.f32.mrf.mxu0
      %v489 = vadd.f32 %v359, %v488
      %490 = vmatmul.bf16.gmra.mxu0 %v398
      %v491 = vpop.f32.mrf.mxu0
      %v492 = vadd.f32 %v359, %v491
      %v493 = vpop.f32.mrf.mxu0
      %v494 = vadd.f32 %v359, %v493
      %495 = vmatmul.bf16.gmra.mxu0 %v399
      %v496 = vpop.f32.mrf.mxu0
      %v497 = vadd.f32 %v359, %v496
      %v498 = vpop.f32.mrf.mxu0
      %v499 = vadd.f32 %v359, %v498
      %500 = vmatmul.bf16.gmra.mxu0 %v400
      %v501 = vpop.f32.mrf.mxu0
      %v502 = vadd.f32 %v359, %v501
      %v503 = vpop.f32.mrf.mxu0
      %v504 = vadd.f32 %v359, %v503
      %505 = vdwg.mxu0
      %v506 = vpack.c.bf16 %v467, %v467
      %v507 = vpack.c.bf16 %v469, %v469
      %v508 = vpack.c.bf16 %v472, %v472
      %v509 = vpack.c.bf16 %v474, %v474
      %v510 = vpack.c.bf16 %v477, %v477
      %v511 = vpack.c.bf16 %v479, %v479
      %v512 = vpack.c.bf16 %v482, %v482
      %v513 = vpack.c.bf16 %v484, %v484
      %v514 = vpack.c.bf16 %v487, %v487
      %v515 = vpack.c.bf16 %v489, %v489
      %v516 = vpack.c.bf16 %v492, %v492
      %v517 = vpack.c.bf16 %v494, %v494
      %v518 = vpack.c.bf16 %v497, %v497
      %v519 = vpack.c.bf16 %v499, %v499
      %v520 = vpack.c.bf16 %v502, %v502
      %v521 = vpack.c.bf16 %v504, %v504
      %522 = vst [vmem:[%s5] sm:$0xf] %v506
      %523 = vst [vmem:[%s5 + $0x4] sm:$0xf] %v507
      %524 = vst [vmem:[%s5 + $0x8] sm:$0xf] %v508
      %525 = vst [vmem:[%s5 + $0xc] sm:$0xf] %v509
      %526 = vst [vmem:[%s5 + $0x10] sm:$0xf] %v510
      %527 = vst [vmem:[%s5 + $0x14] sm:$0xf] %v511
      %528 = vst [vmem:[%s5 + $0x18] sm:$0xf] %v512
      %529 = vst [vmem:[%s5 + $0x1c] sm:$0xf] %v513
      %530 = vst [vmem:[%s5 + $0x20] sm:$0xf] %v514
      %531 = vst [vmem:[%s5 + $0x24] sm:$0xf] %v515
      %532 = vst [vmem:[%s5 + $0x28] sm:$0xf] %v516
      %533 = vst [vmem:[%s5 + $0x2c] sm:$0xf] %v517
      %534 = vst [vmem:[%s5 + $0x30] sm:$0xf] %v518
      %535 = vst [vmem:[%s5 + $0x34] sm:$0xf] %v519
      %536 = vst [vmem:[%s5 + $0x38] sm:$0xf] %v520
      %537 = vst [vmem:[%s5 + $0x3c] sm:$0xf] %v521
    $region29: #{gnn_hgnn_forward.5} parent=1 // pred_fallthru
      _
    // Predicated region
    $region30: #{gnn_hgnn_forward.5} parent=1 // pred_check
      _
    $region31: #{gnn_hgnn_forward.5} parent=1 // pred_check_branch
      %539 = sbr.rel (0) target = $region33
    $region32: #{gnn_hgnn_forward.5} parent=1 // pred_region
      %541 = vsyncadd [#allocation4], 0
      %s542 = sshll.u32 [#allocation3], 4
      %s543 = int_to_ptr.vmem [resolvable:$true] %s542
      %s544 = sshll.u32 %s4, 4
      %s545 = int_to_ptr.hbm [resolvable:$true] %s544
      %550 = dma.vmem_to_hbm [thread:$0]  %s543, 1024, %s545, [#allocation4], 64, 64, 4
    $region33: #{gnn_hgnn_forward.5} parent=1 // pred_fallthru
      _
    // Predicated region
    $region34: #{gnn_hgnn_forward.5} parent=1 // pred_check
      _
    $region35: #{gnn_hgnn_forward.5} parent=1 // pred_check_branch
      %552 = sbr.rel (0) target = $region37
    $region36: #{gnn_hgnn_forward.5} parent=1 // pred_region
      _
    $region37: #{gnn_hgnn_forward.5} parent=1 // pred_fallthru
      _
    // Predicated region
    $region38: #{gnn_hgnn_forward.5} parent=1 // pred_check
      _
    $region39: #{gnn_hgnn_forward.5} parent=1 // pred_check_branch
      %554 = sbr.rel (0) target = $region41
    $region40: #{gnn_hgnn_forward.5} parent=1 // pred_region
      %556 = dma.done [#allocation4], 1024
    $region41: #{gnn_hgnn_forward.5} parent=1 // pred_fallthru
      _
    // Predicated region
    $region42: #{gnn_hgnn_forward.5} parent=1 // pred_check
      _
    $region43: #{gnn_hgnn_forward.5} parent=1 // pred_check_branch
      %558 = sbr.rel (0) target = $region45
    $region44: #{gnn_hgnn_forward.5} parent=1 // pred_region
      _
    $region45: #{gnn_hgnn_forward.5} parent=1 // pred_fallthru
      _
    %559 = vsyncpa [#allocation4], 1

// kernel: gnn_hgnn_forward.7
$region0: #{gnn_hgnn_forward.7}
  #allocation0 [shape = 'u32[]', space=smem, size = 0x4, offset = 0x4, fixed_abs, tag = 'smem constant byte address 0x4 - core index']
  #allocation1 [shape = 'u32[72,128]{1,0:T(1,128)}', space=vmem, size = 0x9000, scoped, tag = 'internal scratch']
  #allocation2 [shape = 'f32[128,128]{1,0:T(8,128)}', space=vmem, size = 0x10000, scoped, tag = 'scratch operand']
  %s0 = inlined_call_operand.vmem [shape: bf16[128,128], index: 0, kind: input, shape index: {}]
  %s1 = inlined_call_operand.vmem [shape: bf16[128,128], index: 1, kind: input, shape index: {}]
  %s2 = inlined_call_operand.vmem [shape: bf16[128,128], index: 2, kind: output, shape index: {}]
  %s3 = sld [smem:[#allocation0]]
  $region30: #{gnn_hgnn_forward.7} parent=0
    _
  %s5 = ssub.s32 1, %s3
  %s6 = scalar_select 0, %s5, %s3
  // Predicated region
  $region2: #{gnn_hgnn_forward.7} parent=0 // pred_check
    _
  $region3: #{gnn_hgnn_forward.7} parent=0 // pred_check_branch
    %8 = sbr.rel (0) target = $region5
  $region4: #{gnn_hgnn_forward.7} parent=0 // pred_region
    _
  $region5: #{gnn_hgnn_forward.7} parent=0 // pred_fallthru
    _
  // Predicated region
  $region6: #{gnn_hgnn_forward.7} parent=0 // pred_check
    _
  $region7: #{gnn_hgnn_forward.7} parent=0 // pred_check_branch
    %10 = sbr.rel (0) target = $region9
  $region8: #{gnn_hgnn_forward.7} parent=0 // pred_region
    _
  $region9: #{gnn_hgnn_forward.7} parent=0 // pred_fallthru
    _
  %s11 = smul.u32 0, 128
  %s12 = sshra.s32 %s11, 3
  %s13 = sand.u32 %s11, 7
  %s14 = smul.addr %s12, 4
  %s15 = scalar_lea.vmem %s1, %s14
  %v16 = vld [vmem:[%s15] sm:$0xf]
  %v17 = vld [vmem:[%s15 + $0x4] sm:$0xf]
  %v18 = vld [vmem:[%s15 + $0x8] sm:$0xf]
  %v19 = vld [vmem:[%s15 + $0xc] sm:$0xf]
  %v20 = vld [vmem:[%s15 + $0x10] sm:$0xf]
  %v21 = vld [vmem:[%s15 + $0x14] sm:$0xf]
  %v22 = vld [vmem:[%s15 + $0x18] sm:$0xf]
  %v23 = vld [vmem:[%s15 + $0x1c] sm:$0xf]
  %v24 = vld [vmem:[%s15 + $0x20] sm:$0xf]
  %v25 = vld [vmem:[%s15 + $0x24] sm:$0xf]
  %v26 = vld [vmem:[%s15 + $0x28] sm:$0xf]
  %v27 = vld [vmem:[%s15 + $0x2c] sm:$0xf]
  %v28 = vld [vmem:[%s15 + $0x30] sm:$0xf]
  %v29 = vld [vmem:[%s15 + $0x34] sm:$0xf]
  %v30 = vld [vmem:[%s15 + $0x38] sm:$0xf]
  %v31 = vld [vmem:[%s15 + $0x3c] sm:$0xf]
  %v32 = vld [vmem:[%s0] sm:$0xf]
  %v33 = vld [vmem:[%s0 + $0x4] sm:$0xf]
  %v34 = vld [vmem:[%s0 + $0x8] sm:$0xf]
  %v35 = vld [vmem:[%s0 + $0xc] sm:$0xf]
  %v36 = vld [vmem:[%s0 + $0x10] sm:$0xf]
  %v37 = vld [vmem:[%s0 + $0x14] sm:$0xf]
  %v38 = vld [vmem:[%s0 + $0x18] sm:$0xf]
  %v39 = vld [vmem:[%s0 + $0x1c] sm:$0xf]
  %v40 = vld [vmem:[%s0 + $0x20] sm:$0xf]
  %v41 = vld [vmem:[%s0 + $0x24] sm:$0xf]
  %v42 = vld [vmem:[%s0 + $0x28] sm:$0xf]
  %v43 = vld [vmem:[%s0 + $0x2c] sm:$0xf]
  %v44 = vld [vmem:[%s0 + $0x30] sm:$0xf]
  %v45 = vld [vmem:[%s0 + $0x34] sm:$0xf]
  %v46 = vld [vmem:[%s0 + $0x38] sm:$0xf]
  %v47 = vld [vmem:[%s0 + $0x3c] sm:$0xf]
  %v64 = vunpack.c.l.b16 %v32
  %v65 = vunpack.c.l.b16 %v33
  %v66 = vunpack.c.l.b16 %v34
  %v67 = vunpack.c.l.b16 %v35
  %v68 = vunpack.c.l.b16 %v36
  %v69 = vunpack.c.l.b16 %v37
  %v70 = vunpack.c.l.b16 %v38
  %v71 = vunpack.c.l.b16 %v39
  %v72 = vunpack.c.l.b16 %v40
  %v73 = vunpack.c.l.b16 %v41
  %v74 = vunpack.c.l.b16 %v42
  %v75 = vunpack.c.l.b16 %v43
  %v76 = vunpack.c.l.b16 %v44
  %v77 = vunpack.c.l.b16 %v45
  %v78 = vunpack.c.l.b16 %v46
  %v79 = vunpack.c.l.b16 %v47
  %v80 = vpack.c.b16 %v65, %v64
  %v81 = vpack.c.b16 %v67, %v66
  %v82 = vpack.c.b16 %v69, %v68
  %v83 = vpack.c.b16 %v71, %v70
  %v84 = vpack.c.b16 %v73, %v72
  %v85 = vpack.c.b16 %v75, %v74
  %v86 = vpack.c.b16 %v77, %v76
  %v87 = vpack.c.b16 %v79, %v78
  %v112 = vunpack.c.l.b16 %v16
  %v113 = vunpack.c.l.b16 %v17
  %v114 = vunpack.c.l.b16 %v18
  %v115 = vunpack.c.l.b16 %v19
  %v116 = vunpack.c.l.b16 %v20
  %v117 = vunpack.c.l.b16 %v21
  %v118 = vunpack.c.l.b16 %v22
  %v119 = vunpack.c.l.b16 %v23
  %v120 = vunpack.c.l.b16 %v24
  %v121 = vunpack.c.l.b16 %v25
  %v122 = vunpack.c.l.b16 %v26
  %v123 = vunpack.c.l.b16 %v27
  %v124 = vunpack.c.l.b16 %v28
  %v125 = vunpack.c.l.b16 %v29
  %v126 = vunpack.c.l.b16 %v30
  %v127 = vunpack.c.l.b16 %v31
  %v128 = vpack.c.b16 %v113, %v112
  %v129 = vpack.c.b16 %v115, %v114
  %v130 = vpack.c.b16 %v117, %v116
  %v131 = vpack.c.b16 %v119, %v118
  %v132 = vpack.c.b16 %v121, %v120
  %v133 = vpack.c.b16 %v123, %v122
  %v134 = vpack.c.b16 %v125, %v124
  %v135 = vpack.c.b16 %v127, %v126
  %144 = vmatpush.bf16.msra.mxu0 %v135
  %145 = vmatpush.bf16.msra.mxu0 %v134
  %146 = vmatpush.bf16.msra.mxu0 %v133
  %147 = vmatpush.bf16.msra.mxu0 %v132
  %148 = vmatpush.bf16.msra.mxu0 %v131
  %149 = vmatpush.bf16.msra.mxu0 %v130
  %150 = vmatpush.bf16.msra.mxu0 %v129
  %151 = vmatpush.bf16.msra.mxu0 %v128
  %152 = vmatmul.bf16.gmra.mxu0 %v80
  %v153 = vpop.f32.mrf.mxu0
  %v154 = vadd.f32 0.0, %v153
  %v155 = vpop.f32.mrf.mxu0
  %v156 = vadd.f32 0.0, %v155
  %157 = vmatmul.bf16.gmra.mxu0 %v81
  %v158 = vpop.f32.mrf.mxu0
  %v159 = vadd.f32 0.0, %v158
  %v160 = vpop.f32.mrf.mxu0
  %v161 = vadd.f32 0.0, %v160
  %162 = vmatmul.bf16.gmra.mxu0 %v82
  %v163 = vpop.f32.mrf.mxu0
  %v164 = vadd.f32 0.0, %v163
  %v165 = vpop.f32.mrf.mxu0
  %v166 = vadd.f32 0.0, %v165
  %167 = vmatmul.bf16.gmra.mxu0 %v83
  %v168 = vpop.f32.mrf.mxu0
  %v169 = vadd.f32 0.0, %v168
  %v170 = vpop.f32.mrf.mxu0
  %v171 = vadd.f32 0.0, %v170
  %172 = vmatmul.bf16.gmra.mxu0 %v84
  %v173 = vpop.f32.mrf.mxu0
  %v174 = vadd.f32 0.0, %v173
  %v175 = vpop.f32.mrf.mxu0
  %v176 = vadd.f32 0.0, %v175
  %177 = vmatmul.bf16.gmra.mxu0 %v85
  %v178 = vpop.f32.mrf.mxu0
  %v179 = vadd.f32 0.0, %v178
  %v180 = vpop.f32.mrf.mxu0
  %v181 = vadd.f32 0.0, %v180
  %182 = vmatmul.bf16.gmra.mxu0 %v86
  %v183 = vpop.f32.mrf.mxu0
  %v184 = vadd.f32 0.0, %v183
  %v185 = vpop.f32.mrf.mxu0
  %v186 = vadd.f32 0.0, %v185
  %187 = vmatmul.bf16.gmra.mxu0 %v87
  %v188 = vpop.f32.mrf.mxu0
  %v189 = vadd.f32 0.0, %v188
  %v190 = vpop.f32.mrf.mxu0
  %v191 = vadd.f32 0.0, %v190
  %192 = vdwg.mxu0
  %p193 = scmp.eq.s32.totalorder 0, 0
  // Predicated region
  $region10: #{gnn_hgnn_forward.7} parent=0 // pred_check
    %p194 = pneg %p193
  $region11: #{gnn_hgnn_forward.7} parent=0 // pred_check_branch
    %196 = sbr.rel (%p194) target = $region13
  $region12: #{gnn_hgnn_forward.7} parent=0 // pred_region
    %197 = vst [vmem:[#allocation2] sm:$0xff] %v154
    %198 = vst [vmem:[#allocation2 + $0x8] sm:$0xff] %v156
    %199 = vst [vmem:[#allocation2 + $0x10] sm:$0xff] %v159
    %200 = vst [vmem:[#allocation2 + $0x18] sm:$0xff] %v161
    %201 = vst [vmem:[#allocation2 + $0x20] sm:$0xff] %v164
    %202 = vst [vmem:[#allocation2 + $0x28] sm:$0xff] %v166
    %203 = vst [vmem:[#allocation2 + $0x30] sm:$0xff] %v169
    %204 = vst [vmem:[#allocation2 + $0x38] sm:$0xff] %v171
    %205 = vst [vmem:[#allocation2 + $0x40] sm:$0xff] %v174
    %206 = vst [vmem:[#allocation2 + $0x48] sm:$0xff] %v176
    %207 = vst [vmem:[#allocation2 + $0x50] sm:$0xff] %v179
    %208 = vst [vmem:[#allocation2 + $0x58] sm:$0xff] %v181
    %209 = vst [vmem:[#allocation2 + $0x60] sm:$0xff] %v184
    %210 = vst [vmem:[#allocation2 + $0x68] sm:$0xff] %v186
    %211 = vst [vmem:[#allocation2 + $0x70] sm:$0xff] %v189
    %212 = vst [vmem:[#allocation2 + $0x78] sm:$0xff] %v191
  $region13: #{gnn_hgnn_forward.7} parent=0 // pred_fallthru
    _
  %p213 = scmp.gt.s32.totalorder 0, 0
  // Predicated region
  $region14: #{gnn_hgnn_forward.7} parent=0 // pred_check
    %p214 = pneg %p213
  $region15: #{gnn_hgnn_forward.7} parent=0 // pred_check_branch
    %216 = sbr.rel (%p214) target = $region17
  $region16: #{gnn_hgnn_forward.7} parent=0 // pred_region
    %v217 = vld [vmem:[#allocation2] sm:$0xff]
    %v218 = vld [vmem:[#allocation2 + $0x8] sm:$0xff]
    %v219 = vld [vmem:[#allocation2 + $0x10] sm:$0xff]
    %v220 = vld [vmem:[#allocation2 + $0x18] sm:$0xff]
    %v221 = vld [vmem:[#allocation2 + $0x20] sm:$0xff]
    %v222 = vld [vmem:[#allocation2 + $0x28] sm:$0xff]
    %v223 = vld [vmem:[#allocation2 + $0x30] sm:$0xff]
    %v224 = vld [vmem:[#allocation2 + $0x38] sm:$0xff]
    %v225 = vld [vmem:[#allocation2 + $0x40] sm:$0xff]
    %v226 = vld [vmem:[#allocation2 + $0x48] sm:$0xff]
    %v227 = vld [vmem:[#allocation2 + $0x50] sm:$0xff]
    %v228 = vld [vmem:[#allocation2 + $0x58] sm:$0xff]
    %v229 = vld [vmem:[#allocation2 + $0x60] sm:$0xff]
    %v230 = vld [vmem:[#allocation2 + $0x68] sm:$0xff]
    %v231 = vld [vmem:[#allocation2 + $0x70] sm:$0xff]
    %v232 = vld [vmem:[#allocation2 + $0x78] sm:$0xff]
    %v233 = vadd.f32 %v217, %v154
    %v234 = vadd.f32 %v218, %v156
    %v235 = vadd.f32 %v219, %v159
    %v236 = vadd.f32 %v220, %v161
    %v237 = vadd.f32 %v221, %v164
    %v238 = vadd.f32 %v222, %v166
    %v239 = vadd.f32 %v223, %v169
    %v240 = vadd.f32 %v224, %v171
    %v241 = vadd.f32 %v225, %v174
    %v242 = vadd.f32 %v226, %v176
    %v243 = vadd.f32 %v227, %v179
    %v244 = vadd.f32 %v228, %v181
    %v245 = vadd.f32 %v229, %v184
    %v246 = vadd.f32 %v230, %v186
    %v247 = vadd.f32 %v231, %v189
    %v248 = vadd.f32 %v232, %v191
    %249 = vst [vmem:[#allocation2] sm:$0xff] %v233
    %250 = vst [vmem:[#allocation2 + $0x8] sm:$0xff] %v234
    %251 = vst [vmem:[#allocation2 + $0x10] sm:$0xff] %v235
    %252 = vst [vmem:[#allocation2 + $0x18] sm:$0xff] %v236
    %253 = vst [vmem:[#allocation2 + $0x20] sm:$0xff] %v237
    %254 = vst [vmem:[#allocation2 + $0x28] sm:$0xff] %v238
    %255 = vst [vmem:[#allocation2 + $0x30] sm:$0xff] %v239
    %256 = vst [vmem:[#allocation2 + $0x38] sm:$0xff] %v240
    %257 = vst [vmem:[#allocation2 + $0x40] sm:$0xff] %v241
    %258 = vst [vmem:[#allocation2 + $0x48] sm:$0xff] %v242
    %259 = vst [vmem:[#allocation2 + $0x50] sm:$0xff] %v243
    %260 = vst [vmem:[#allocation2 + $0x58] sm:$0xff] %v244
    %261 = vst [vmem:[#allocation2 + $0x60] sm:$0xff] %v245
    %262 = vst [vmem:[#allocation2 + $0x68] sm:$0xff] %v246
    %263 = vst [vmem:[#allocation2 + $0x70] sm:$0xff] %v247
    %264 = vst [vmem:[#allocation2 + $0x78] sm:$0xff] %v248
  $region17: #{gnn_hgnn_forward.7} parent=0 // pred_fallthru
    _
  // Predicated region
  $region18: #{gnn_hgnn_forward.7} parent=0 // pred_check
    %p265 = pneg %p193
  $region19: #{gnn_hgnn_forward.7} parent=0 // pred_check_branch
    %267 = sbr.rel (%p265) target = $region21
  $region20: #{gnn_hgnn_forward.7} parent=0 // pred_region
    %v268 = vld [vmem:[#allocation2] sm:$0xff]
    %v269 = vld [vmem:[#allocation2 + $0x8] sm:$0xff]
    %v270 = vld [vmem:[#allocation2 + $0x10] sm:$0xff]
    %v271 = vld [vmem:[#allocation2 + $0x18] sm:$0xff]
    %v272 = vld [vmem:[#allocation2 + $0x20] sm:$0xff]
    %v273 = vld [vmem:[#allocation2 + $0x28] sm:$0xff]
    %v274 = vld [vmem:[#allocation2 + $0x30] sm:$0xff]
    %v275 = vld [vmem:[#allocation2 + $0x38] sm:$0xff]
    %v276 = vld [vmem:[#allocation2 + $0x40] sm:$0xff]
    %v277 = vld [vmem:[#allocation2 + $0x48] sm:$0xff]
    %v278 = vld [vmem:[#allocation2 + $0x50] sm:$0xff]
    %v279 = vld [vmem:[#allocation2 + $0x58] sm:$0xff]
    %v280 = vld [vmem:[#allocation2 + $0x60] sm:$0xff]
    %v281 = vld [vmem:[#allocation2 + $0x68] sm:$0xff]
    %v282 = vld [vmem:[#allocation2 + $0x70] sm:$0xff]
    %v283 = vld [vmem:[#allocation2 + $0x78] sm:$0xff]
    %v284 = vmax.f32 %v268, 0.0
    %v285 = vmax.f32 %v269, 0.0
    %v286 = vmax.f32 %v270, 0.0
    %v287 = vmax.f32 %v271, 0.0
    %v288 = vmax.f32 %v272, 0.0
    %v289 = vmax.f32 %v273, 0.0
    %v290 = vmax.f32 %v274, 0.0
    %v291 = vmax.f32 %v275, 0.0
    %v292 = vmax.f32 %v276, 0.0
    %v293 = vmax.f32 %v277, 0.0
    %v294 = vmax.f32 %v278, 0.0
    %v295 = vmax.f32 %v279, 0.0
    %v296 = vmax.f32 %v280, 0.0
    %v297 = vmax.f32 %v281, 0.0
    %v298 = vmax.f32 %v282, 0.0
    %v299 = vmax.f32 %v283, 0.0
    %v300 = vpack.c.bf16 %v284, %v284
    %v301 = vpack.c.bf16 %v285, %v285
    %v302 = vpack.c.bf16 %v286, %v286
    %v303 = vpack.c.bf16 %v287, %v287
    %v304 = vpack.c.bf16 %v288, %v288
    %v305 = vpack.c.bf16 %v289, %v289
    %v306 = vpack.c.bf16 %v290, %v290
    %v307 = vpack.c.bf16 %v291, %v291
    %v308 = vpack.c.bf16 %v292, %v292
    %v309 = vpack.c.bf16 %v293, %v293
    %v310 = vpack.c.bf16 %v294, %v294
    %v311 = vpack.c.bf16 %v295, %v295
    %v312 = vpack.c.bf16 %v296, %v296
    %v313 = vpack.c.bf16 %v297, %v297
    %v314 = vpack.c.bf16 %v298, %v298
    %v315 = vpack.c.bf16 %v299, %v299
    %316 = vst [vmem:[%s2] sm:$0xf] %v300
    %317 = vst [vmem:[%s2 + $0x4] sm:$0xf] %v301
    %318 = vst [vmem:[%s2 + $0x8] sm:$0xf] %v302
    %319 = vst [vmem:[%s2 + $0xc] sm:$0xf] %v303
    %320 = vst [vmem:[%s2 + $0x10] sm:$0xf] %v304
    %321 = vst [vmem:[%s2 + $0x14] sm:$0xf] %v305
    %322 = vst [vmem:[%s2 + $0x18] sm:$0xf] %v306
    %323 = vst [vmem:[%s2 + $0x1c] sm:$0xf] %v307
    %324 = vst [vmem:[%s2 + $0x20] sm:$0xf] %v308
    %325 = vst [vmem:[%s2 + $0x24] sm:$0xf] %v309
    %326 = vst [vmem:[%s2 + $0x28] sm:$0xf] %v310
    %327 = vst [vmem:[%s2 + $0x2c] sm:$0xf] %v311
    %328 = vst [vmem:[%s2 + $0x30] sm:$0xf] %v312
    %329 = vst [vmem:[%s2 + $0x34] sm:$0xf] %v313
    %330 = vst [vmem:[%s2 + $0x38] sm:$0xf] %v314
    %331 = vst [vmem:[%s2 + $0x3c] sm:$0xf] %v315
  $region21: #{gnn_hgnn_forward.7} parent=0 // pred_fallthru
    _
  // Predicated region
  $region22: #{gnn_hgnn_forward.7} parent=0 // pred_check
    _
  $region23: #{gnn_hgnn_forward.7} parent=0 // pred_check_branch
    %333 = sbr.rel (0) target = $region25
  $region24: #{gnn_hgnn_forward.7} parent=0 // pred_region
    _
  $region25: #{gnn_hgnn_forward.7} parent=0 // pred_fallthru
    _
  // Predicated region
  $region26: #{gnn_hgnn_forward.7} parent=0 // pred_check
    _
  $region27: #{gnn_hgnn_forward.7} parent=0 // pred_check_branch
    %335 = sbr.rel (0) target = $region29
  $region28: #{gnn_hgnn_forward.7} parent=0 // pred_region
    _
  $region29: #{gnn_hgnn_forward.7} parent=0 // pred_fallthru
    _

// kernel: gnn_hgnn_forward.6
$region0: #{gnn_hgnn_forward.6}
  #allocation0 [shape = 'u32[]', space=smem, size = 0x4, offset = 0x4, fixed_abs, tag = 'smem constant byte address 0x4 - core index']
  #allocation1 [shape = 'u32[72,128]{1,0:T(1,128)}', space=vmem, size = 0x9000, scoped, tag = 'internal scratch']
  #allocation2 [shape = 'f32[128,128]{1,0:T(8,128)}', space=vmem, size = 0x10000, scoped, tag = 'scratch operand']
  %s0 = inlined_call_operand.vmem [shape: bf16[128,128], index: 0, kind: input, shape index: {}]
  %s1 = inlined_call_operand.vmem [shape: bf16[128,128], index: 1, kind: input, shape index: {}]
  %s2 = inlined_call_operand.vmem [shape: bf16[128,128], index: 2, kind: input, shape index: {}]
  %s3 = inlined_call_operand.vmem [shape: f32[1,128], index: 3, kind: input, shape index: {}]
  %s4 = inlined_call_operand.vmem [shape: bf16[128,128], index: 4, kind: output, shape index: {0}]
  %s5 = inlined_call_operand.vmem [shape: bf16[128,128], index: 5, kind: output, shape index: {1}]
  %6 = xla_tuple %s4, %s5
  %s7 = sld [smem:[#allocation0]]
  $region46: #{gnn_hgnn_forward.6} parent=0
    _
  %s9 = ssub.s32 1, %s7
  %s10 = scalar_select 0, %s9, %s7
  // Predicated region
  $region2: #{gnn_hgnn_forward.6} parent=0 // pred_check
    _
  $region3: #{gnn_hgnn_forward.6} parent=0 // pred_check_branch
    %12 = sbr.rel (0) target = $region5
  $region4: #{gnn_hgnn_forward.6} parent=0 // pred_region
    _
  $region5: #{gnn_hgnn_forward.6} parent=0 // pred_fallthru
    _
  // Predicated region
  $region6: #{gnn_hgnn_forward.6} parent=0 // pred_check
    _
  $region7: #{gnn_hgnn_forward.6} parent=0 // pred_check_branch
    %14 = sbr.rel (0) target = $region9
  $region8: #{gnn_hgnn_forward.6} parent=0 // pred_region
    _
  $region9: #{gnn_hgnn_forward.6} parent=0 // pred_fallthru
    _
  // Predicated region
  $region10: #{gnn_hgnn_forward.6} parent=0 // pred_check
    _
  $region11: #{gnn_hgnn_forward.6} parent=0 // pred_check_branch
    %16 = sbr.rel (0) target = $region13
  $region12: #{gnn_hgnn_forward.6} parent=0 // pred_region
    _
  $region13: #{gnn_hgnn_forward.6} parent=0 // pred_fallthru
    _
  // Predicated region
  $region14: #{gnn_hgnn_forward.6} parent=0 // pred_check
    _
  $region15: #{gnn_hgnn_forward.6} parent=0 // pred_check_branch
    %18 = sbr.rel (0) target = $region17
  $region16: #{gnn_hgnn_forward.6} parent=0 // pred_region
    _
  $region17: #{gnn_hgnn_forward.6} parent=0 // pred_fallthru
    _
  %s19 = smul.u32 0, 128
  %s20 = sshra.s32 %s19, 3
  %s21 = sand.u32 %s19, 7
  %s22 = smul.addr %s20, 4
  %s23 = scalar_lea.vmem %s1, %s22
  %v24 = vld [vmem:[%s23] sm:$0xf]
  %v25 = vld [vmem:[%s23 + $0x4] sm:$0xf]
  %v26 = vld [vmem:[%s23 + $0x8] sm:$0xf]
  %v27 = vld [vmem:[%s23 + $0xc] sm:$0xf]
  %v28 = vld [vmem:[%s23 + $0x10] sm:$0xf]
  %v29 = vld [vmem:[%s23 + $0x14] sm:$0xf]
  %v30 = vld [vmem:[%s23 + $0x18] sm:$0xf]
  %v31 = vld [vmem:[%s23 + $0x1c] sm:$0xf]
  %v32 = vld [vmem:[%s23 + $0x20] sm:$0xf]
  %v33 = vld [vmem:[%s23 + $0x24] sm:$0xf]
  %v34 = vld [vmem:[%s23 + $0x28] sm:$0xf]
  %v35 = vld [vmem:[%s23 + $0x2c] sm:$0xf]
  %v36 = vld [vmem:[%s23 + $0x30] sm:$0xf]
  %v37 = vld [vmem:[%s23 + $0x34] sm:$0xf]
  %v38 = vld [vmem:[%s23 + $0x38] sm:$0xf]
  %v39 = vld [vmem:[%s23 + $0x3c] sm:$0xf]
  %v40 = vld [vmem:[%s0] sm:$0xf]
  %v41 = vld [vmem:[%s0 + $0x4] sm:$0xf]
  %v42 = vld [vmem:[%s0 + $0x8] sm:$0xf]
  %v43 = vld [vmem:[%s0 + $0xc] sm:$0xf]
  %v44 = vld [vmem:[%s0 + $0x10] sm:$0xf]
  %v45 = vld [vmem:[%s0 + $0x14] sm:$0xf]
  %v46 = vld [vmem:[%s0 + $0x18] sm:$0xf]
  %v47 = vld [vmem:[%s0 + $0x1c] sm:$0xf]
  %v48 = vld [vmem:[%s0 + $0x20] sm:$0xf]
  %v49 = vld [vmem:[%s0 + $0x24] sm:$0xf]
  %v50 = vld [vmem:[%s0 + $0x28] sm:$0xf]
  %v51 = vld [vmem:[%s0 + $0x2c] sm:$0xf]
  %v52 = vld [vmem:[%s0 + $0x30] sm:$0xf]
  %v53 = vld [vmem:[%s0 + $0x34] sm:$0xf]
  %v54 = vld [vmem:[%s0 + $0x38] sm:$0xf]
  %v55 = vld [vmem:[%s0 + $0x3c] sm:$0xf]
  %v72 = vunpack.c.l.b16 %v40
  %v73 = vunpack.c.l.b16 %v41
  %v74 = vunpack.c.l.b16 %v42
  %v75 = vunpack.c.l.b16 %v43
  %v76 = vunpack.c.l.b16 %v44
  %v77 = vunpack.c.l.b16 %v45
  %v78 = vunpack.c.l.b16 %v46
  %v79 = vunpack.c.l.b16 %v47
  %v80 = vunpack.c.l.b16 %v48
  %v81 = vunpack.c.l.b16 %v49
  %v82 = vunpack.c.l.b16 %v50
  %v83 = vunpack.c.l.b16 %v51
  %v84 = vunpack.c.l.b16 %v52
  %v85 = vunpack.c.l.b16 %v53
  %v86 = vunpack.c.l.b16 %v54
  %v87 = vunpack.c.l.b16 %v55
  %v88 = vpack.c.b16 %v73, %v72
  %v89 = vpack.c.b16 %v75, %v74
  %v90 = vpack.c.b16 %v77, %v76
  %v91 = vpack.c.b16 %v79, %v78
  %v92 = vpack.c.b16 %v81, %v80
  %v93 = vpack.c.b16 %v83, %v82
  %v94 = vpack.c.b16 %v85, %v84
  %v95 = vpack.c.b16 %v87, %v86
  %v120 = vunpack.c.l.b16 %v24
  %v121 = vunpack.c.l.b16 %v25
  %v122 = vunpack.c.l.b16 %v26
  %v123 = vunpack.c.l.b16 %v27
  %v124 = vunpack.c.l.b16 %v28
  %v125 = vunpack.c.l.b16 %v29
  %v126 = vunpack.c.l.b16 %v30
  %v127 = vunpack.c.l.b16 %v31
  %v128 = vunpack.c.l.b16 %v32
  %v129 = vunpack.c.l.b16 %v33
  %v130 = vunpack.c.l.b16 %v34
  %v131 = vunpack.c.l.b16 %v35
  %v132 = vunpack.c.l.b16 %v36
  %v133 = vunpack.c.l.b16 %v37
  %v134 = vunpack.c.l.b16 %v38
  %v135 = vunpack.c.l.b16 %v39
  %v136 = vpack.c.b16 %v121, %v120
  %v137 = vpack.c.b16 %v123, %v122
  %v138 = vpack.c.b16 %v125, %v124
  %v139 = vpack.c.b16 %v127, %v126
  %v140 = vpack.c.b16 %v129, %v128
  %v141 = vpack.c.b16 %v131, %v130
  %v142 = vpack.c.b16 %v133, %v132
  %v143 = vpack.c.b16 %v135, %v134
  %152 = vmatpush.bf16.msra.mxu0 %v143
  %153 = vmatpush.bf16.msra.mxu0 %v142
  %154 = vmatpush.bf16.msra.mxu0 %v141
  %155 = vmatpush.bf16.msra.mxu0 %v140
  %156 = vmatpush.bf16.msra.mxu0 %v139
  %157 = vmatpush.bf16.msra.mxu0 %v138
  %158 = vmatpush.bf16.msra.mxu0 %v137
  %159 = vmatpush.bf16.msra.mxu0 %v136
  %160 = vmatmul.bf16.gmra.mxu0 %v88
  %v161 = vpop.f32.mrf.mxu0
  %v162 = vadd.f32 0.0, %v161
  %v163 = vpop.f32.mrf.mxu0
  %v164 = vadd.f32 0.0, %v163
  %165 = vmatmul.bf16.gmra.mxu0 %v89
  %v166 = vpop.f32.mrf.mxu0
  %v167 = vadd.f32 0.0, %v166
  %v168 = vpop.f32.mrf.mxu0
  %v169 = vadd.f32 0.0, %v168
  %170 = vmatmul.bf16.gmra.mxu0 %v90
  %v171 = vpop.f32.mrf.mxu0
  %v172 = vadd.f32 0.0, %v171
  %v173 = vpop.f32.mrf.mxu0
  %v174 = vadd.f32 0.0, %v173
  %175 = vmatmul.bf16.gmra.mxu0 %v91
  %v176 = vpop.f32.mrf.mxu0
  %v177 = vadd.f32 0.0, %v176
  %v178 = vpop.f32.mrf.mxu0
  %v179 = vadd.f32 0.0, %v178
  %180 = vmatmul.bf16.gmra.mxu0 %v92
  %v181 = vpop.f32.mrf.mxu0
  %v182 = vadd.f32 0.0, %v181
  %v183 = vpop.f32.mrf.mxu0
  %v184 = vadd.f32 0.0, %v183
  %185 = vmatmul.bf16.gmra.mxu0 %v93
  %v186 = vpop.f32.mrf.mxu0
  %v187 = vadd.f32 0.0, %v186
  %v188 = vpop.f32.mrf.mxu0
  %v189 = vadd.f32 0.0, %v188
  %190 = vmatmul.bf16.gmra.mxu0 %v94
  %v191 = vpop.f32.mrf.mxu0
  %v192 = vadd.f32 0.0, %v191
  %v193 = vpop.f32.mrf.mxu0
  %v194 = vadd.f32 0.0, %v193
  %195 = vmatmul.bf16.gmra.mxu0 %v95
  %v196 = vpop.f32.mrf.mxu0
  %v197 = vadd.f32 0.0, %v196
  %v198 = vpop.f32.mrf.mxu0
  %v199 = vadd.f32 0.0, %v198
  %200 = vdwg.mxu0
  %p201 = scmp.eq.s32.totalorder 0, 0
  // Predicated region
  $region18: #{gnn_hgnn_forward.6} parent=0 // pred_check
    %p202 = pneg %p201
  $region19: #{gnn_hgnn_forward.6} parent=0 // pred_check_branch
    %204 = sbr.rel (%p202) target = $region21
  $region20: #{gnn_hgnn_forward.6} parent=0 // pred_region
    %205 = vst [vmem:[#allocation2] sm:$0xff] %v162
    %206 = vst [vmem:[#allocation2 + $0x8] sm:$0xff] %v164
    %207 = vst [vmem:[#allocation2 + $0x10] sm:$0xff] %v167
    %208 = vst [vmem:[#allocation2 + $0x18] sm:$0xff] %v169
    %209 = vst [vmem:[#allocation2 + $0x20] sm:$0xff] %v172
    %210 = vst [vmem:[#allocation2 + $0x28] sm:$0xff] %v174
    %211 = vst [vmem:[#allocation2 + $0x30] sm:$0xff] %v177
    %212 = vst [vmem:[#allocation2 + $0x38] sm:$0xff] %v179
    %213 = vst [vmem:[#allocation2 + $0x40] sm:$0xff] %v182
    %214 = vst [vmem:[#allocation2 + $0x48] sm:$0xff] %v184
    %215 = vst [vmem:[#allocation2 + $0x50] sm:$0xff] %v187
    %216 = vst [vmem:[#allocation2 + $0x58] sm:$0xff] %v189
    %217 = vst [vmem:[#allocation2 + $0x60] sm:$0xff] %v192
    %218 = vst [vmem:[#allocation2 + $0x68] sm:$0xff] %v194
    %219 = vst [vmem:[#allocation2 + $0x70] sm:$0xff] %v197
    %220 = vst [vmem:[#allocation2 + $0x78] sm:$0xff] %v199
  $region21: #{gnn_hgnn_forward.6} parent=0 // pred_fallthru
    _
  %p221 = scmp.gt.s32.totalorder 0, 0
  // Predicated region
  $region22: #{gnn_hgnn_forward.6} parent=0 // pred_check
    %p222 = pneg %p221
  $region23: #{gnn_hgnn_forward.6} parent=0 // pred_check_branch
    %224 = sbr.rel (%p222) target = $region25
  $region24: #{gnn_hgnn_forward.6} parent=0 // pred_region
    %v225 = vld [vmem:[#allocation2] sm:$0xff]
    %v226 = vld [vmem:[#allocation2 + $0x8] sm:$0xff]
    %v227 = vld [vmem:[#allocation2 + $0x10] sm:$0xff]
    %v228 = vld [vmem:[#allocation2 + $0x18] sm:$0xff]
    %v229 = vld [vmem:[#allocation2 + $0x20] sm:$0xff]
    %v230 = vld [vmem:[#allocation2 + $0x28] sm:$0xff]
    %v231 = vld [vmem:[#allocation2 + $0x30] sm:$0xff]
    %v232 = vld [vmem:[#allocation2 + $0x38] sm:$0xff]
    %v233 = vld [vmem:[#allocation2 + $0x40] sm:$0xff]
    %v234 = vld [vmem:[#allocation2 + $0x48] sm:$0xff]
    %v235 = vld [vmem:[#allocation2 + $0x50] sm:$0xff]
    %v236 = vld [vmem:[#allocation2 + $0x58] sm:$0xff]
    %v237 = vld [vmem:[#allocation2 + $0x60] sm:$0xff]
    %v238 = vld [vmem:[#allocation2 + $0x68] sm:$0xff]
    %v239 = vld [vmem:[#allocation2 + $0x70] sm:$0xff]
    %v240 = vld [vmem:[#allocation2 + $0x78] sm:$0xff]
    %v241 = vadd.f32 %v225, %v162
    %v242 = vadd.f32 %v226, %v164
    %v243 = vadd.f32 %v227, %v167
    %v244 = vadd.f32 %v228, %v169
    %v245 = vadd.f32 %v229, %v172
    %v246 = vadd.f32 %v230, %v174
    %v247 = vadd.f32 %v231, %v177
    %v248 = vadd.f32 %v232, %v179
    %v249 = vadd.f32 %v233, %v182
    %v250 = vadd.f32 %v234, %v184
    %v251 = vadd.f32 %v235, %v187
    %v252 = vadd.f32 %v236, %v189
    %v253 = vadd.f32 %v237, %v192
    %v254 = vadd.f32 %v238, %v194
    %v255 = vadd.f32 %v239, %v197
    %v256 = vadd.f32 %v240, %v199
    %257 = vst [vmem:[#allocation2] sm:$0xff] %v241
    %258 = vst [vmem:[#allocation2 + $0x8] sm:$0xff] %v242
    %259 = vst [vmem:[#allocation2 + $0x10] sm:$0xff] %v243
    %260 = vst [vmem:[#allocation2 + $0x18] sm:$0xff] %v244
    %261 = vst [vmem:[#allocation2 + $0x20] sm:$0xff] %v245
    %262 = vst [vmem:[#allocation2 + $0x28] sm:$0xff] %v246
    %263 = vst [vmem:[#allocation2 + $0x30] sm:$0xff] %v247
    %264 = vst [vmem:[#allocation2 + $0x38] sm:$0xff] %v248
    %265 = vst [vmem:[#allocation2 + $0x40] sm:$0xff] %v249
    %266 = vst [vmem:[#allocation2 + $0x48] sm:$0xff] %v250
    %267 = vst [vmem:[#allocation2 + $0x50] sm:$0xff] %v251
    %268 = vst [vmem:[#allocation2 + $0x58] sm:$0xff] %v252
    %269 = vst [vmem:[#allocation2 + $0x60] sm:$0xff] %v253
    %270 = vst [vmem:[#allocation2 + $0x68] sm:$0xff] %v254
    %271 = vst [vmem:[#allocation2 + $0x70] sm:$0xff] %v255
    %272 = vst [vmem:[#allocation2 + $0x78] sm:$0xff] %v256
  $region25: #{gnn_hgnn_forward.6} parent=0 // pred_fallthru
    _
  // Predicated region
  $region26: #{gnn_hgnn_forward.6} parent=0 // pred_check
    %p273 = pneg %p201
  $region27: #{gnn_hgnn_forward.6} parent=0 // pred_check_branch
    %275 = sbr.rel (%p273) target = $region29
  $region28: #{gnn_hgnn_forward.6} parent=0 // pred_region
    %v276 = vld [vmem:[#allocation2] sm:$0xff]
    %v277 = vld [vmem:[#allocation2 + $0x8] sm:$0xff]
    %v278 = vld [vmem:[#allocation2 + $0x10] sm:$0xff]
    %v279 = vld [vmem:[#allocation2 + $0x18] sm:$0xff]
    %v280 = vld [vmem:[#allocation2 + $0x20] sm:$0xff]
    %v281 = vld [vmem:[#allocation2 + $0x28] sm:$0xff]
    %v282 = vld [vmem:[#allocation2 + $0x30] sm:$0xff]
    %v283 = vld [vmem:[#allocation2 + $0x38] sm:$0xff]
    %v284 = vld [vmem:[#allocation2 + $0x40] sm:$0xff]
    %v285 = vld [vmem:[#allocation2 + $0x48] sm:$0xff]
    %v286 = vld [vmem:[#allocation2 + $0x50] sm:$0xff]
    %v287 = vld [vmem:[#allocation2 + $0x58] sm:$0xff]
    %v288 = vld [vmem:[#allocation2 + $0x60] sm:$0xff]
    %v289 = vld [vmem:[#allocation2 + $0x68] sm:$0xff]
    %v290 = vld [vmem:[#allocation2 + $0x70] sm:$0xff]
    %v291 = vld [vmem:[#allocation2 + $0x78] sm:$0xff]
    %v292 = vmax.f32 %v276, 0.0
    %v293 = vmax.f32 %v277, 0.0
    %v294 = vmax.f32 %v278, 0.0
    %v295 = vmax.f32 %v279, 0.0
    %v296 = vmax.f32 %v280, 0.0
    %v297 = vmax.f32 %v281, 0.0
    %v298 = vmax.f32 %v282, 0.0
    %v299 = vmax.f32 %v283, 0.0
    %v300 = vmax.f32 %v284, 0.0
    %v301 = vmax.f32 %v285, 0.0
    %v302 = vmax.f32 %v286, 0.0
    %v303 = vmax.f32 %v287, 0.0
    %v304 = vmax.f32 %v288, 0.0
    %v305 = vmax.f32 %v289, 0.0
    %v306 = vmax.f32 %v290, 0.0
    %v307 = vmax.f32 %v291, 0.0
    %v308 = vpack.c.bf16 %v292, %v292
    %v309 = vpack.c.bf16 %v293, %v293
    %v310 = vpack.c.bf16 %v294, %v294
    %v311 = vpack.c.bf16 %v295, %v295
    %v312 = vpack.c.bf16 %v296, %v296
    %v313 = vpack.c.bf16 %v297, %v297
    %v314 = vpack.c.bf16 %v298, %v298
    %v315 = vpack.c.bf16 %v299, %v299
    %v316 = vpack.c.bf16 %v300, %v300
    %v317 = vpack.c.bf16 %v301, %v301
    %v318 = vpack.c.bf16 %v302, %v302
    %v319 = vpack.c.bf16 %v303, %v303
    %v320 = vpack.c.bf16 %v304, %v304
    %v321 = vpack.c.bf16 %v305, %v305
    %v322 = vpack.c.bf16 %v306, %v306
    %v323 = vpack.c.bf16 %v307, %v307
    %324 = vst [vmem:[%s4] sm:$0xf] %v308
    %325 = vst [vmem:[%s4 + $0x4] sm:$0xf] %v309
    %326 = vst [vmem:[%s4 + $0x8] sm:$0xf] %v310
    %327 = vst [vmem:[%s4 + $0xc] sm:$0xf] %v311
    %328 = vst [vmem:[%s4 + $0x10] sm:$0xf] %v312
    %329 = vst [vmem:[%s4 + $0x14] sm:$0xf] %v313
    %330 = vst [vmem:[%s4 + $0x18] sm:$0xf] %v314
    %331 = vst [vmem:[%s4 + $0x1c] sm:$0xf] %v315
    %332 = vst [vmem:[%s4 + $0x20] sm:$0xf] %v316
    %333 = vst [vmem:[%s4 + $0x24] sm:$0xf] %v317
    %334 = vst [vmem:[%s4 + $0x28] sm:$0xf] %v318
    %335 = vst [vmem:[%s4 + $0x2c] sm:$0xf] %v319
    %336 = vst [vmem:[%s4 + $0x30] sm:$0xf] %v320
    %337 = vst [vmem:[%s4 + $0x34] sm:$0xf] %v321
    %338 = vst [vmem:[%s4 + $0x38] sm:$0xf] %v322
    %339 = vst [vmem:[%s4 + $0x3c] sm:$0xf] %v323
    %v340 = vld [vmem:[%s2] sm:$0xf]
    %v341 = vld [vmem:[%s2 + $0x4] sm:$0xf]
    %v342 = vld [vmem:[%s2 + $0x8] sm:$0xf]
    %v343 = vld [vmem:[%s2 + $0xc] sm:$0xf]
    %v344 = vld [vmem:[%s2 + $0x10] sm:$0xf]
    %v345 = vld [vmem:[%s2 + $0x14] sm:$0xf]
    %v346 = vld [vmem:[%s2 + $0x18] sm:$0xf]
    %v347 = vld [vmem:[%s2 + $0x1c] sm:$0xf]
    %v348 = vld [vmem:[%s2 + $0x20] sm:$0xf]
    %v349 = vld [vmem:[%s2 + $0x24] sm:$0xf]
    %v350 = vld [vmem:[%s2 + $0x28] sm:$0xf]
    %v351 = vld [vmem:[%s2 + $0x2c] sm:$0xf]
    %v352 = vld [vmem:[%s2 + $0x30] sm:$0xf]
    %v353 = vld [vmem:[%s2 + $0x34] sm:$0xf]
    %v354 = vld [vmem:[%s2 + $0x38] sm:$0xf]
    %v355 = vld [vmem:[%s2 + $0x3c] sm:$0xf]
    %v356 = vld [vmem:[%s3] sm:$0x1]
    %v358 = vperm.slane %v356, 0
    %v376 = vunpack.c.l.b16 %v308
    %v377 = vunpack.c.l.b16 %v309
    %v378 = vunpack.c.l.b16 %v310
    %v379 = vunpack.c.l.b16 %v311
    %v380 = vunpack.c.l.b16 %v312
    %v381 = vunpack.c.l.b16 %v313
    %v382 = vunpack.c.l.b16 %v314
    %v383 = vunpack.c.l.b16 %v315
    %v384 = vunpack.c.l.b16 %v316
    %v385 = vunpack.c.l.b16 %v317
    %v386 = vunpack.c.l.b16 %v318
    %v387 = vunpack.c.l.b16 %v319
    %v388 = vunpack.c.l.b16 %v320
    %v389 = vunpack.c.l.b16 %v321
    %v390 = vunpack.c.l.b16 %v322
    %v391 = vunpack.c.l.b16 %v323
    %v392 = vpack.c.b16 %v377, %v376
    %v393 = vpack.c.b16 %v379, %v378
    %v394 = vpack.c.b16 %v381, %v380
    %v395 = vpack.c.b16 %v383, %v382
    %v396 = vpack.c.b16 %v385, %v384
    %v397 = vpack.c.b16 %v387, %v386
    %v398 = vpack.c.b16 %v389, %v388
    %v399 = vpack.c.b16 %v391, %v390
    %v424 = vunpack.c.l.b16 %v340
    %v425 = vunpack.c.l.b16 %v341
    %v426 = vunpack.c.l.b16 %v342
    %v427 = vunpack.c.l.b16 %v343
    %v428 = vunpack.c.l.b16 %v344
    %v429 = vunpack.c.l.b16 %v345
    %v430 = vunpack.c.l.b16 %v346
    %v431 = vunpack.c.l.b16 %v347
    %v432 = vunpack.c.l.b16 %v348
    %v433 = vunpack.c.l.b16 %v349
    %v434 = vunpack.c.l.b16 %v350
    %v435 = vunpack.c.l.b16 %v351
    %v436 = vunpack.c.l.b16 %v352
    %v437 = vunpack.c.l.b16 %v353
    %v438 = vunpack.c.l.b16 %v354
    %v439 = vunpack.c.l.b16 %v355
    %v440 = vpack.c.b16 %v425, %v424
    %v441 = vpack.c.b16 %v427, %v426
    %v442 = vpack.c.b16 %v429, %v428
    %v443 = vpack.c.b16 %v431, %v430
    %v444 = vpack.c.b16 %v433, %v432
    %v445 = vpack.c.b16 %v435, %v434
    %v446 = vpack.c.b16 %v437, %v436
    %v447 = vpack.c.b16 %v439, %v438
    %456 = vmatpush.bf16.msra.mxu0 %v447
    %457 = vmatpush.bf16.msra.mxu0 %v446
    %458 = vmatpush.bf16.msra.mxu0 %v445
    %459 = vmatpush.bf16.msra.mxu0 %v444
    %460 = vmatpush.bf16.msra.mxu0 %v443
    %461 = vmatpush.bf16.msra.mxu0 %v442
    %462 = vmatpush.bf16.msra.mxu0 %v441
    %463 = vmatpush.bf16.msra.mxu0 %v440
    %464 = vmatmul.bf16.gmra.mxu0 %v392
    %v465 = vpop.f32.mrf.mxu0
    %v466 = vadd.f32 %v358, %v465
    %v467 = vpop.f32.mrf.mxu0
    %v468 = vadd.f32 %v358, %v467
    %469 = vmatmul.bf16.gmra.mxu0 %v393
    %v470 = vpop.f32.mrf.mxu0
    %v471 = vadd.f32 %v358, %v470
    %v472 = vpop.f32.mrf.mxu0
    %v473 = vadd.f32 %v358, %v472
    %474 = vmatmul.bf16.gmra.mxu0 %v394
    %v475 = vpop.f32.mrf.mxu0
    %v476 = vadd.f32 %v358, %v475
    %v477 = vpop.f32.mrf.mxu0
    %v478 = vadd.f32 %v358, %v477
    %479 = vmatmul.bf16.gmra.mxu0 %v395
    %v480 = vpop.f32.mrf.mxu0
    %v481 = vadd.f32 %v358, %v480
    %v482 = vpop.f32.mrf.mxu0
    %v483 = vadd.f32 %v358, %v482
    %484 = vmatmul.bf16.gmra.mxu0 %v396
    %v485 = vpop.f32.mrf.mxu0
    %v486 = vadd.f32 %v358, %v485
    %v487 = vpop.f32.mrf.mxu0
    %v488 = vadd.f32 %v358, %v487
    %489 = vmatmul.bf16.gmra.mxu0 %v397
    %v490 = vpop.f32.mrf.mxu0
    %v491 = vadd.f32 %v358, %v490
    %v492 = vpop.f32.mrf.mxu0
    %v493 = vadd.f32 %v358, %v492
    %494 = vmatmul.bf16.gmra.mxu0 %v398
    %v495 = vpop.f32.mrf.mxu0
    %v496 = vadd.f32 %v358, %v495
    %v497 = vpop.f32.mrf.mxu0
    %v498 = vadd.f32 %v358, %v497
    %499 = vmatmul.bf16.gmra.mxu0 %v399
    %v500 = vpop.f32.mrf.mxu0
    %v501 = vadd.f32 %v358, %v500
    %v502 = vpop.f32.mrf.mxu0
    %v503 = vadd.f32 %v358, %v502
    %504 = vdwg.mxu0
    %v505 = vpack.c.bf16 %v466, %v466
    %v506 = vpack.c.bf16 %v468, %v468
    %v507 = vpack.c.bf16 %v471, %v471
    %v508 = vpack.c.bf16 %v473, %v473
    %v509 = vpack.c.bf16 %v476, %v476
    %v510 = vpack.c.bf16 %v478, %v478
    %v511 = vpack.c.bf16 %v481, %v481
    %v512 = vpack.c.bf16 %v483, %v483
    %v513 = vpack.c.bf16 %v486, %v486
    %v514 = vpack.c.bf16 %v488, %v488
    %v515 = vpack.c.bf16 %v491, %v491
    %v516 = vpack.c.bf16 %v493, %v493
    %v517 = vpack.c.bf16 %v496, %v496
    %v518 = vpack.c.bf16 %v498, %v498
    %v519 = vpack.c.bf16 %v501, %v501
    %v520 = vpack.c.bf16 %v503, %v503
    %521 = vst [vmem:[%s5] sm:$0xf] %v505
    %522 = vst [vmem:[%s5 + $0x4] sm:$0xf] %v506
    %523 = vst [vmem:[%s5 + $0x8] sm:$0xf] %v507
    %524 = vst [vmem:[%s5 + $0xc] sm:$0xf] %v508
    %525 = vst [vmem:[%s5 + $0x10] sm:$0xf] %v509
    %526 = vst [vmem:[%s5 + $0x14] sm:$0xf] %v510
    %527 = vst [vmem:[%s5 + $0x18] sm:$0xf] %v511
    %528 = vst [vmem:[%s5 + $0x1c] sm:$0xf] %v512
    %529 = vst [vmem:[%s5 + $0x20] sm:$0xf] %v513
    %530 = vst [vmem:[%s5 + $0x24] sm:$0xf] %v514
    %531 = vst [vmem:[%s5 + $0x28] sm:$0xf] %v515
    %532 = vst [vmem:[%s5 + $0x2c] sm:$0xf] %v516
    %533 = vst [vmem:[%s5 + $0x30] sm:$0xf] %v517
    %534 = vst [vmem:[%s5 + $0x34] sm:$0xf] %v518
    %535 = vst [vmem:[%s5 + $0x38] sm:$0xf] %v519
    %536 = vst [vmem:[%s5 + $0x3c] sm:$0xf] %v520
  $region29: #{gnn_hgnn_forward.6} parent=0 // pred_fallthru
    _
  // Predicated region
  $region30: #{gnn_hgnn_forward.6} parent=0 // pred_check
    _
  $region31: #{gnn_hgnn_forward.6} parent=0 // pred_check_branch
    %538 = sbr.rel (0) target = $region33
  $region32: #{gnn_hgnn_forward.6} parent=0 // pred_region
    _
  $region33: #{gnn_hgnn_forward.6} parent=0 // pred_fallthru
    _
  // Predicated region
  $region34: #{gnn_hgnn_forward.6} parent=0 // pred_check
    _
  $region35: #{gnn_hgnn_forward.6} parent=0 // pred_check_branch
    %540 = sbr.rel (0) target = $region37
  $region36: #{gnn_hgnn_forward.6} parent=0 // pred_region
    _
  $region37: #{gnn_hgnn_forward.6} parent=0 // pred_fallthru
    _
  // Predicated region
  $region38: #{gnn_hgnn_forward.6} parent=0 // pred_check
    _
  $region39: #{gnn_hgnn_forward.6} parent=0 // pred_check_branch
    %542 = sbr.rel (0) target = $region41
  $region40: #{gnn_hgnn_forward.6} parent=0 // pred_region
    _
  $region41: #{gnn_hgnn_forward.6} parent=0 // pred_fallthru
    _
  // Predicated region
  $region42: #{gnn_hgnn_forward.6} parent=0 // pred_check
    _
  $region43: #{gnn_hgnn_forward.6} parent=0 // pred_check_branch
    %544 = sbr.rel (0) target = $region45
  $region44: #{gnn_hgnn_forward.6} parent=0 // pred_region
    _
  $region45: #{gnn_hgnn_forward.6} parent=0 // pred_fallthru
    _

</llo_original>
